<compile_context>
chip_gen: v7x
topology: tpu7x:2x2x1
jax: 0.10.0
libtpu: 0.0.40
codegen_flags: <defaults>
</compile_context>

<pallas_src>
import functools

import jax
import jax.numpy as jnp
from jax import lax
from jax.experimental import pallas as pl
from jax.experimental.pallas import tpu as pltpu

NEG_SLOPE = 0.01          # nn.LeakyReLU default
EPS = 1e-5                # LayerNorm / InstanceNorm3d default eps
_VMEM_LIMIT = 32 * 1024 * 1024


def _leaky(x):
    return jnp.where(x >= 0.0, x, NEG_SLOPE * x)


# ---------------------------------------------------------------------------
# Kernel 1: text branch.
#   tok  = LeakyReLU(LayerNorm(text_emb_T @ W_lin + b_lin))          (S, C)
#   tpre = tok @ W_w + b_w                                           (S, Co)
#   tstats rows 0,1 = sum_S(tpre), sum_S(tpre^2)   (accumulator)     (8, Co)
# ---------------------------------------------------------------------------
def _text_kernel(txt_ref, wlin_ref, blin_ref, gamma_ref, beta_ref,
                 ww_ref, bw_ref, tok_ref, tpre_ref, tstats_ref):
    si = pl.program_id(0)

    @pl.when(si == 0)
    def _():
        tstats_ref[...] = jnp.zeros_like(tstats_ref)

    t = jnp.dot(txt_ref[...], wlin_ref[...],
                preferred_element_type=jnp.float32) + blin_ref[...]
    mu = jnp.mean(t, axis=-1, keepdims=True)
    var = jnp.mean(jnp.square(t - mu), axis=-1, keepdims=True)
    t = (t - mu) * lax.rsqrt(var + EPS)
    tok = _leaky(t * gamma_ref[...] + beta_ref[...])
    tok_ref[...] = tok

    pre = jnp.dot(tok, ww_ref[...],
                  preferred_element_type=jnp.float32) + bw_ref[...]
    tpre_ref[...] = pre

    co = pre.shape[-1]
    upd = jnp.concatenate(
        [jnp.sum(pre, axis=0, keepdims=True),
         jnp.sum(pre * pre, axis=0, keepdims=True),
         jnp.zeros((6, co), jnp.float32)], axis=0)
    tstats_ref[...] += upd


def _text_stage(txt_pad, wlin_pad, blin, gamma, beta, ww, bw, *, ts):
    s, ncls = txt_pad.shape
    c = wlin_pad.shape[1]
    co = ww.shape[1]
    n_s = s // ts
    return pl.pallas_call(
        _text_kernel,
        out_shape=(jax.ShapeDtypeStruct((s, c), jnp.float32),
                   jax.ShapeDtypeStruct((s, co), jnp.float32),
                   jax.ShapeDtypeStruct((8, co), jnp.float32)),
        grid_spec=pltpu.PrefetchScalarGridSpec(
            num_scalar_prefetch=0,
            grid=(n_s,),
            in_specs=[
                pl.BlockSpec((ts, ncls), lambda si: (si, 0)),
                pl.BlockSpec((ncls, c), lambda si: (0, 0)),
                pl.BlockSpec((1, c), lambda si: (0, 0)),
                pl.BlockSpec((1, c), lambda si: (0, 0)),
                pl.BlockSpec((1, c), lambda si: (0, 0)),
                pl.BlockSpec((c, co), lambda si: (0, 0)),
                pl.BlockSpec((1, co), lambda si: (0, 0)),
            ],
            out_specs=[
                pl.BlockSpec((ts, c), lambda si: (si, 0)),
                pl.BlockSpec((ts, co), lambda si: (si, 0)),
                pl.BlockSpec((8, co), lambda si: (0, 0)),
            ]),
        compiler_params=pltpu.CompilerParams(
            dimension_semantics=("arbitrary",),
            vmem_limit_bytes=_VMEM_LIMIT),
    )(txt_pad, wlin_pad, blin, gamma, beta, ww, bw)


# ---------------------------------------------------------------------------
# Kernel 2: image-path 1x1x1 convs + their spatial statistics.
#   a = img @ W_w + b_w,  m = img @ W_mix_img + tok @ W_mix_txt + b_mix
#   istats rows 0..3 = sum(a), sum(a^2), sum(m), sum(m^2)  per batch.
# grid = (batch, spatial tiles): batch "parallel", spatial "arbitrary".
# ---------------------------------------------------------------------------
def _pre_kernel(x_ref, tok_ref, ww_ref, bw_ref, wmi_ref, wmt_ref, bm_ref,
                a_ref, m_ref, istats_ref):
    si = pl.program_id(1)

    @pl.when(si == 0)
    def _():
        istats_ref[...] = jnp.zeros_like(istats_ref)

    x = x_ref[0]            # (TS, C) image voxels, channels-last
    t = tok_ref[...]        # (TS, C) text token (shared across batch)

    a = jnp.dot(x, ww_ref[...], preferred_element_type=jnp.float32) + bw_ref[...]
    m = (jnp.dot(x, wmi_ref[...], preferred_element_type=jnp.float32)
         + jnp.dot(t, wmt_ref[...], preferred_element_type=jnp.float32)
         + bm_ref[...])

    a_ref[0] = a
    m_ref[0] = m

    co = a.shape[-1]
    upd = jnp.concatenate(
        [jnp.sum(a, axis=0, keepdims=True),
         jnp.sum(a * a, axis=0, keepdims=True),
         jnp.sum(m, axis=0, keepdims=True),
         jnp.sum(m * m, axis=0, keepdims=True),
         jnp.zeros((4, co), jnp.float32)], axis=0)
    istats_ref[...] += upd[None]


def _pre_stage(x, tok, ww, bw, wmi, wmt, bm, *, ts):
    b, s, c = x.shape
    co = ww.shape[1]
    n_s = s // ts
    return pl.pallas_call(
        _pre_kernel,
        out_shape=(jax.ShapeDtypeStruct((b, s, co), jnp.float32),
                   jax.ShapeDtypeStruct((b, s, co), jnp.float32),
                   jax.ShapeDtypeStruct((b, 8, co), jnp.float32)),
        grid_spec=pltpu.PrefetchScalarGridSpec(
            num_scalar_prefetch=0,
            grid=(b, n_s),
            in_specs=[
                pl.BlockSpec((1, ts, c), lambda bi, si: (bi, si, 0)),
                pl.BlockSpec((ts, c), lambda bi, si: (si, 0)),
                pl.BlockSpec((c, co), lambda bi, si: (0, 0)),
                pl.BlockSpec((1, co), lambda bi, si: (0, 0)),
                pl.BlockSpec((c, co), lambda bi, si: (0, 0)),
                pl.BlockSpec((c, co), lambda bi, si: (0, 0)),
                pl.BlockSpec((1, co), lambda bi, si: (0, 0)),
            ],
            out_specs=[
                pl.BlockSpec((1, ts, co), lambda bi, si: (bi, si, 0)),
                pl.BlockSpec((1, ts, co), lambda bi, si: (bi, si, 0)),
                pl.BlockSpec((1, 8, co), lambda bi, si: (bi, 0, 0)),
            ]),
        compiler_params=pltpu.CompilerParams(
            dimension_semantics=("parallel", "arbitrary"),
            vmem_limit_bytes=_VMEM_LIMIT),
    )(x, tok, ww, bw, wmi, wmt, bm)


# ---------------------------------------------------------------------------
# Kernel 3: gate pre-activation.
#   w1 = InstNorm(a), w2 = InstNorm(tpre), p = LeakyReLU(w1 + w2)
#   c  = p @ W_psi + b_psi   (Co -> 1, done as a lane reduction)
#   cstats cols 0,1 = sum_S(c), sum_S(c^2)   per batch (accumulator).
# Processes all batches per spatial tile so every block stays lane/sublane
# dense; grid = (spatial tiles,) marked "arbitrary" (stats accumulate).
# ---------------------------------------------------------------------------
def _gate_kernel(a_ref, tpre_ref, istats_ref, tstats_ref, wpsi_ref, bpsi_ref,
                 c_ref, cstats_ref, *, total_s):
    si = pl.program_id(0)

    @pl.when(si == 0)
    def _():
        cstats_ref[...] = jnp.zeros_like(cstats_ref)

    inv_s = 1.0 / total_s
    ist = istats_ref[...]                        # (B, 8, Co)
    mean_a = ist[:, 0:1, :] * inv_s              # (B, 1, Co)
    var_a = ist[:, 1:2, :] * inv_s - mean_a * mean_a
    rstd_a = lax.rsqrt(var_a + EPS)

    tst = tstats_ref[...]                        # (8, Co)
    mean_t = tst[0:1, :] * inv_s                 # (1, Co)
    var_t = tst[1:2, :] * inv_s - mean_t * mean_t
    rstd_t = lax.rsqrt(var_t + EPS)

    w1 = (a_ref[...] - mean_a) * rstd_a          # (B, TS, Co)
    w2 = (tpre_ref[...] - mean_t) * rstd_t       # (TS, Co) -> broadcast
    p = _leaky(w1 + w2)                          # (B, TS, Co)

    c = jnp.sum(p * wpsi_ref[...], axis=-1) + bpsi_ref[...]   # (B, TS)
    c_ref[...] = c

    bsz = c.shape[0]
    upd = jnp.concatenate(
        [jnp.sum(c, axis=1, keepdims=True),
         jnp.sum(c * c, axis=1, keepdims=True),
         jnp.zeros((bsz, 6), jnp.float32)], axis=1)
    cstats_ref[...] += upd


def _gate_stage(a, tpre, istats, tstats, wpsi_row, bpsi, *, ts):
    b, s, co = a.shape
    n_s = s // ts
    kernel = functools.partial(_gate_kernel, total_s=float(s))
    return pl.pallas_call(
        kernel,
        out_shape=(jax.ShapeDtypeStruct((b, s), jnp.float32),
                   jax.ShapeDtypeStruct((b, 8), jnp.float32)),
        grid_spec=pltpu.PrefetchScalarGridSpec(
            num_scalar_prefetch=0,
            grid=(n_s,),
            in_specs=[
                pl.BlockSpec((b, ts, co), lambda si: (0, si, 0)),
                pl.BlockSpec((ts, co), lambda si: (si, 0)),
                pl.BlockSpec((b, 8, co), lambda si: (0, 0, 0)),
                pl.BlockSpec((8, co), lambda si: (0, 0)),
                pl.BlockSpec((1, co), lambda si: (0, 0)),
                pl.BlockSpec((1, 1), lambda si: (0, 0)),
            ],
            out_specs=[
                pl.BlockSpec((b, ts), lambda si: (0, si)),
                pl.BlockSpec((b, 8), lambda si: (0, 0)),
            ]),
        compiler_params=pltpu.CompilerParams(
            dimension_semantics=("arbitrary",),
            vmem_limit_bytes=_VMEM_LIMIT),
    )(a, tpre, istats, tstats, wpsi_row, bpsi)


# ---------------------------------------------------------------------------
# Kernel 4: finalize.
#   con = LeakyReLU(InstNorm(m)),  psi = Sigmoid(InstNorm(c)),  out = con * psi
# ---------------------------------------------------------------------------
def _final_kernel(m_ref, c_ref, istats_ref, cstats_ref, out_ref, *, total_s):
    inv_s = 1.0 / total_s
    ist = istats_ref[...]                        # (B, 8, Co)
    mean_m = ist[:, 2:3, :] * inv_s              # (B, 1, Co)
    var_m = ist[:, 3:4, :] * inv_s - mean_m * mean_m
    rstd_m = lax.rsqrt(var_m + EPS)

    cst = cstats_ref[...]                        # (B, 8)
    mean_c = cst[:, 0:1] * inv_s                 # (B, 1)
    var_c = cst[:, 1:2] * inv_s - mean_c * mean_c
    rstd_c = lax.rsqrt(var_c + EPS)

    con = _leaky((m_ref[...] - mean_m) * rstd_m)             # (B, TS, Co)
    psi = jax.nn.sigmoid((c_ref[...] - mean_c) * rstd_c)     # (B, TS)
    out_ref[...] = con * psi[:, :, None]


def _final_stage(m, c, istats, cstats, *, ts):
    b, s, co = m.shape
    n_s = s // ts
    kernel = functools.partial(_final_kernel, total_s=float(s))
    return pl.pallas_call(
        kernel,
        out_shape=jax.ShapeDtypeStruct((b, s, co), jnp.float32),
        grid_spec=pltpu.PrefetchScalarGridSpec(
            num_scalar_prefetch=0,
            grid=(n_s,),
            in_specs=[
                pl.BlockSpec((b, ts, co), lambda si: (0, si, 0)),
                pl.BlockSpec((b, ts), lambda si: (0, si)),
                pl.BlockSpec((b, 8, co), lambda si: (0, 0, 0)),
                pl.BlockSpec((b, 8), lambda si: (0, 0)),
            ],
            out_specs=pl.BlockSpec((b, ts, co), lambda si: (0, si, 0))),
        compiler_params=pltpu.CompilerParams(
            dimension_semantics=("parallel",),
            vmem_limit_bytes=_VMEM_LIMIT),
    )(m, c, istats, cstats)


# ---------------------------------------------------------------------------
# Full forward, parameters and a pure-JAX reference.
# ---------------------------------------------------------------------------
def init_joint_gate_params(key, n_class=2, i_channels=256, o_channels=256):
    c, co = i_channels, o_channels
    ks = jax.random.split(key, 9)
    return dict(
        wlin=0.3 * jax.random.normal(ks[0], (n_class, c), jnp.float32),
        blin=0.1 * jax.random.normal(ks[1], (c,), jnp.float32),
        gamma=1.0 + 0.1 * jax.random.normal(ks[2], (c,), jnp.float32),
        beta=0.1 * jax.random.normal(ks[3], (c,), jnp.float32),
        ww=0.1 * jax.random.normal(ks[4], (c, co), jnp.float32),
        bw=0.1 * jax.random.normal(ks[5], (co,), jnp.float32),
        wpsi=0.1 * jax.random.normal(ks[6], (co,), jnp.float32),
        bpsi=0.05 * jnp.ones((), jnp.float32),
        wmix=0.1 * jax.random.normal(ks[7], (2 * c, co), jnp.float32),
        bmix=0.1 * jax.random.normal(ks[8], (co,), jnp.float32))


def joint_gate_forward(text_embedding, img, params, *, ts=128):
    """Matches Joint_Gate.forward. text_embedding: (n_class, h*w*d), img: (b, C, h, w, d)."""
    b, c, h, w, d = img.shape
    s = h * w * d
    co = params["ww"].shape[1]
    assert s % ts == 0, "spatial volume must be divisible by the tile size"

    # channels-last, spatial flattened: voxels on sublanes, channels on lanes.
    x = jnp.transpose(img.reshape(b, c, s), (0, 2, 1))           # (b, S, C)
    txt = jnp.transpose(text_embedding, (1, 0))                  # (S, n_class)

    # pad the tiny n_class contraction up to one full 128-lane tile.
    n_class = txt.shape[1]
    ncls_pad = max(128, ((n_class + 127) // 128) * 128)
    txt_pad = jnp.pad(txt, ((0, 0), (0, ncls_pad - n_class)))
    wlin_pad = jnp.pad(params["wlin"], ((0, ncls_pad - n_class), (0, 0)))

    tok, tpre, tstats = _text_stage(
        txt_pad, wlin_pad,
        params["blin"].reshape(1, c), params["gamma"].reshape(1, c),
        params["beta"].reshape(1, c), params["ww"],
        params["bw"].reshape(1, co), ts=ts)

    a, m, istats = _pre_stage(
        x, tok, params["ww"], params["bw"].reshape(1, co),
        params["wmix"][:c], params["wmix"][c:],
        params["bmix"].reshape(1, co), ts=ts)

    cpre, cstats = _gate_stage(
        a, tpre, istats, tstats,
        params["wpsi"].reshape(1, co), params["bpsi"].reshape(1, 1), ts=ts)

    out = _final_stage(m, cpre, istats, cstats, ts=ts)           # (b, S, Co)
    return jnp.transpose(out, (0, 2, 1)).reshape(b, co, h, w, d)


def joint_gate_reference(text_embedding, img, params):
    """Pure-JAX reference of Joint_Gate.forward (channels-last math)."""
    b, c, h, w, d = img.shape
    s = h * w * d
    co = params["ww"].shape[1]
    x = jnp.transpose(img.reshape(b, c, s), (0, 2, 1))           # (b, S, C)

    t = jnp.transpose(text_embedding, (1, 0)) @ params["wlin"] + params["blin"]
    mu = jnp.mean(t, axis=-1, keepdims=True)
    var = jnp.var(t, axis=-1, keepdims=True)
    t = (t - mu) / jnp.sqrt(var + EPS) * params["gamma"] + params["beta"]
    tok = jnp.where(t >= 0, t, NEG_SLOPE * t)                    # (S, C)
    tok_b = jnp.broadcast_to(tok, (b, s, c))

    def inorm(y):                                                # over spatial
        m_ = jnp.mean(y, axis=1, keepdims=True)
        v_ = jnp.var(y, axis=1, keepdims=True)
        return (y - m_) / jnp.sqrt(v_ + EPS)

    def leaky(y):
        return jnp.where(y >= 0, y, NEG_SLOPE * y)

    w1 = inorm(x @ params["ww"] + params["bw"])
    w2 = inorm(tok_b @ params["ww"] + params["bw"])
    p = leaky(w1 + w2)
    cpre = p @ params["wpsi"][:, None] + params["bpsi"]          # (b, S, 1)
    psi = jax.nn.sigmoid(inorm(cpre))
    mix = inorm(jnp.concatenate([x, tok_b], axis=-1) @ params["wmix"]
                + params["bmix"])
    out = leaky(mix) * psi                                       # (b, S, Co)
    return jnp.transpose(out, (0, 2, 1)).reshape(b, co, h, w, d)


if __name__ == "__main__":
    n_class, i_channels, o_channels = 2, 256, 256   # module defaults
    b, h, w, d = 2, 8, 8, 8                         # small spatial volume
    s = h * w * d

    key = jax.random.PRNGKey(0)
    k_img, k_txt, k_par = jax.random.split(key, 3)
    img = jax.random.normal(k_img, (b, i_channels, h, w, d), jnp.float32)
    text_embedding = jax.random.normal(k_txt, (n_class, s), jnp.float32)
    params = init_joint_gate_params(k_par, n_class, i_channels, o_channels)

    out = joint_gate_forward(text_embedding, img, params)
    out = jax.block_until_ready(out)

    ref = joint_gate_reference(text_embedding, img, params)
    assert out.shape == (b, o_channels, h, w, d)
    err = float(jnp.max(jnp.abs(out - ref)))
    assert jnp.allclose(out, ref, atol=1e-2, rtol=1e-2), f"max abs err {err}"
    print("KERNEL_OK")
</pallas_src>

<mosaic_0001>
module attributes {stable_mosaic.version = 11 : i64} {
  func.func @_text_kernel(%arg0: i32, %arg1: memref<128x128xf32, #tpu.memory_space<vmem>>, %arg2: memref<128x256xf32, #tpu.memory_space<vmem>>, %arg3: memref<1x256xf32, #tpu.memory_space<vmem>>, %arg4: memref<1x256xf32, #tpu.memory_space<vmem>>, %arg5: memref<1x256xf32, #tpu.memory_space<vmem>>, %arg6: memref<256x256xf32, #tpu.memory_space<vmem>>, %arg7: memref<1x256xf32, #tpu.memory_space<vmem>>, %arg8: memref<128x256xf32, #tpu.memory_space<vmem>>, %arg9: memref<128x256xf32, #tpu.memory_space<vmem>>, %arg10: memref<8x256xf32, #tpu.memory_space<vmem>>) attributes {dimension_semantics = [#tpu.dimension_semantics<arbitrary>], iteration_bounds = array<i64: 4>, scalar_prefetch = 0 : i64, scratch_operands = 0 : i64, tpu.core_type = #tpu.core_type<tc>, window_params = [{transform_indices = @transform_0, window_bounds = array<i64: 128, 128>}, {pipeline_mode = #tpu.pipeline_mode<synchronous>, transform_indices = @transform_1, window_bounds = array<i64: 128, 256>}, {pipeline_mode = #tpu.pipeline_mode<synchronous>, transform_indices = @transform_2, window_bounds = array<i64: 1, 256>}, {pipeline_mode = #tpu.pipeline_mode<synchronous>, transform_indices = @transform_3, window_bounds = array<i64: 1, 256>}, {pipeline_mode = #tpu.pipeline_mode<synchronous>, transform_indices = @transform_4, window_bounds = array<i64: 1, 256>}, {pipeline_mode = #tpu.pipeline_mode<synchronous>, transform_indices = @transform_5, window_bounds = array<i64: 256, 256>}, {pipeline_mode = #tpu.pipeline_mode<synchronous>, transform_indices = @transform_6, window_bounds = array<i64: 1, 256>}, {transform_indices = @transform_7, window_bounds = array<i64: 128, 256>}, {transform_indices = @transform_8, window_bounds = array<i64: 128, 256>}, {pipeline_mode = #tpu.pipeline_mode<synchronous>, transform_indices = @transform_9, window_bounds = array<i64: 8, 256>}]} {
    %c0_i32 = arith.constant 0 : i32
    %0 = arith.cmpi eq, %arg0, %c0_i32 : i32
    %1 = arith.extui %0 : i1 to i32
    %c0_i32_0 = arith.constant 0 : i32
    %2 = arith.cmpi ne, %1, %c0_i32_0 : i32
    scf.if %2 {
      %cst_33 = arith.constant 0.000000e+00 : f32
      %55 = vector.broadcast %cst_33 : f32 to vector<8x256xf32>
      %c0_34 = arith.constant 0 : index
      %c0_35 = arith.constant 0 : index
      %56 = vector.load %arg10[%c0_34, %c0_35] : memref<8x256xf32, #tpu.memory_space<vmem>>, vector<8x256xf32>
      tpu.vector_store %arg10[%c0_34, %c0_35], %55 {strides = array<i32>} : memref<8x256xf32, #tpu.memory_space<vmem>>, vector<8x256xf32>,
    } else {
    }
    %c0 = arith.constant 0 : index
    %c0_1 = arith.constant 0 : index
    %3 = vector.load %arg1[%c0, %c0_1] : memref<128x128xf32, #tpu.memory_space<vmem>>, vector<128x128xf32>
    %c0_2 = arith.constant 0 : index
    %c0_3 = arith.constant 0 : index
    %4 = vector.load %arg2[%c0_2, %c0_3] : memref<128x256xf32, #tpu.memory_space<vmem>>, vector<128x256xf32>
    %cst = arith.constant dense<0.000000e+00> : vector<128x256xf32>
    %5 = tpu.matmul %3, %4, %cst {dimension_numbers = #tpu.dot_dimension_numbers<[1], [0], [0], [1], [0, 0, 1, 1], [], []>} : vector<128x128xf32>, vector<128x256xf32>, vector<128x256xf32> -> vector<128x256xf32>
    %c0_4 = arith.constant 0 : index
    %c0_5 = arith.constant 0 : index
    %6 = vector.load %arg3[%c0_4, %c0_5] : memref<1x256xf32, #tpu.memory_space<vmem>>, vector<1x256xf32>
    %7 = vector.broadcast %6 : vector<1x256xf32> to vector<128x256xf32>
    %8 = arith.addf %5, %7 : vector<128x256xf32>
    %cst_6 = arith.constant dense<0.000000e+00> : vector<128xf32>
    %9 = vector.multi_reduction <add>, %8, %cst_6 [1] : vector<128x256xf32> to vector<128xf32>
    %10 = vector.shape_cast %9 : vector<128xf32> to vector<128x1xf32>
    %cst_7 = arith.constant 2.560000e+02 : f32
    %11 = vector.broadcast %cst_7 : f32 to vector<128x1xf32>
    %12 = arith.divf %10, %11 : vector<128x1xf32>
    %13 = vector.broadcast %12 : vector<128x1xf32> to vector<128x256xf32>
    %14 = arith.subf %8, %13 : vector<128x256xf32>
    %15 = arith.mulf %14, %14 : vector<128x256xf32>
    %cst_8 = arith.constant dense<0.000000e+00> : vector<128xf32>
    %16 = vector.multi_reduction <add>, %15, %cst_8 [1] : vector<128x256xf32> to vector<128xf32>
    %17 = vector.shape_cast %16 : vector<128xf32> to vector<128x1xf32>
    %cst_9 = arith.constant 2.560000e+02 : f32
    %18 = vector.broadcast %cst_9 : f32 to vector<128x1xf32>
    %19 = arith.divf %17, %18 : vector<128x1xf32>
    %20 = vector.broadcast %12 : vector<128x1xf32> to vector<128x256xf32>
    %21 = arith.subf %8, %20 : vector<128x256xf32>
    %cst_10 = arith.constant 9.99999974E-6 : f32
    %22 = vector.broadcast %cst_10 : f32 to vector<128x1xf32>
    %23 = arith.addf %19, %22 : vector<128x1xf32>
    %24 = math.rsqrt %23 : vector<128x1xf32>
    %25 = vector.broadcast %24 : vector<128x1xf32> to vector<128x256xf32>
    %26 = arith.mulf %21, %25 : vector<128x256xf32>
    %c0_11 = arith.constant 0 : index
    %c0_12 = arith.constant 0 : index
    %27 = vector.load %arg4[%c0_11, %c0_12] : memref<1x256xf32, #tpu.memory_space<vmem>>, vector<1x256xf32>
    %28 = vector.broadcast %27 : vector<1x256xf32> to vector<128x256xf32>
    %29 = arith.mulf %26, %28 : vector<128x256xf32>
    %c0_13 = arith.constant 0 : index
    %c0_14 = arith.constant 0 : index
    %30 = vector.load %arg5[%c0_13, %c0_14] : memref<1x256xf32, #tpu.memory_space<vmem>>, vector<1x256xf32>
    %31 = vector.broadcast %30 : vector<1x256xf32> to vector<128x256xf32>
    %32 = arith.addf %29, %31 : vector<128x256xf32>
    %cst_15 = arith.constant 0.000000e+00 : f32
    %33 = vector.broadcast %cst_15 : f32 to vector<128x256xf32>
    %34 = arith.cmpf oge, %32, %33 : vector<128x256xf32>
    %cst_16 = arith.constant 0.00999999977 : f32
    %35 = vector.broadcast %cst_16 : f32 to vector<128x256xf32>
    %36 = arith.mulf %35, %32 : vector<128x256xf32>
    %37 = arith.select %34, %32, %36 : vector<128x256xi1>, vector<128x256xf32>
    %c0_17 = arith.constant 0 : index
    %c0_18 = arith.constant 0 : index
    %38 = vector.load %arg8[%c0_17, %c0_18] : memref<128x256xf32, #tpu.memory_space<vmem>>, vector<128x256xf32>
    tpu.vector_store %arg8[%c0_17, %c0_18], %37 {strides = array<i32>} : memref<128x256xf32, #tpu.memory_space<vmem>>, vector<128x256xf32>,
    %c0_19 = arith.constant 0 : index
    %c0_20 = arith.constant 0 : index
    %39 = vector.load %arg6[%c0_19, %c0_20] : memref<256x256xf32, #tpu.memory_space<vmem>>, vector<256x256xf32>
    %cst_21 = arith.constant dense<0.000000e+00> : vector<128x256xf32>
    %40 = tpu.matmul %37, %39, %cst_21 {dimension_numbers = #tpu.dot_dimension_numbers<[1], [0], [0], [1], [0, 0, 1, 1], [], []>} : vector<128x256xf32>, vector<256x256xf32>, vector<128x256xf32> -> vector<128x256xf32>
    %c0_22 = arith.constant 0 : index
    %c0_23 = arith.constant 0 : index
    %41 = vector.load %arg7[%c0_22, %c0_23] : memref<1x256xf32, #tpu.memory_space<vmem>>, vector<1x256xf32>
    %42 = vector.broadcast %41 : vector<1x256xf32> to vector<128x256xf32>
    %43 = arith.addf %40, %42 : vector<128x256xf32>
    %c0_24 = arith.constant 0 : index
    %c0_25 = arith.constant 0 : index
    %44 = vector.load %arg9[%c0_24, %c0_25] : memref<128x256xf32, #tpu.memory_space<vmem>>, vector<128x256xf32>
    tpu.vector_store %arg9[%c0_24, %c0_25], %43 {strides = array<i32>} : memref<128x256xf32, #tpu.memory_space<vmem>>, vector<128x256xf32>,
    %cst_26 = arith.constant dense<0.000000e+00> : vector<256xf32>
    %45 = vector.multi_reduction <add>, %43, %cst_26 [0] : vector<128x256xf32> to vector<256xf32>
    %46 = vector.shape_cast %45 : vector<256xf32> to vector<1x256xf32>
    %47 = arith.mulf %43, %43 : vector<128x256xf32>
    %cst_27 = arith.constant dense<0.000000e+00> : vector<256xf32>
    %48 = vector.multi_reduction <add>, %47, %cst_27 [0] : vector<128x256xf32> to vector<256xf32>
    %49 = vector.shape_cast %48 : vector<256xf32> to vector<1x256xf32>
    %cst_28 = arith.constant 0.000000e+00 : f32
    %50 = vector.broadcast %cst_28 : f32 to vector<6x256xf32>
    %51 = tpu.concatenate %46, %49, %50 in 0 : vector<1x256xf32>, vector<1x256xf32>, vector<6x256xf32> -> vector<8x256xf32>
    %c0_29 = arith.constant 0 : index
    %c0_30 = arith.constant 0 : index
    %52 = vector.load %arg10[%c0_29, %c0_30] : memref<8x256xf32, #tpu.memory_space<vmem>>, vector<8x256xf32>
    %53 = arith.addf %52, %51 : vector<8x256xf32>
    %c0_31 = arith.constant 0 : index
    %c0_32 = arith.constant 0 : index
    %54 = vector.load %arg10[%c0_31, %c0_32] : memref<8x256xf32, #tpu.memory_space<vmem>>, vector<8x256xf32>
    tpu.vector_store %arg10[%c0_31, %c0_32], %53 {strides = array<i32>} : memref<8x256xf32, #tpu.memory_space<vmem>>, vector<8x256xf32>,
    return
  }
  func.func @transform_0(%arg0: i32) -> (i32, i32) {
    %c0_i32 = arith.constant 0 : i32
    %c0_i32_0 = arith.constant 0 : i32
    return %arg0, %c0_i32 : i32, i32
  }
  func.func @transform_1(%arg0: i32) -> (i32, i32) {
    %c0_i32 = arith.constant 0 : i32
    %c0_i32_0 = arith.constant 0 : i32
    %c0_i32_1 = arith.constant 0 : i32
    return %c0_i32, %c0_i32_0 : i32, i32
  }
  func.func @transform_2(%arg0: i32) -> (i32, i32) {
    %c0_i32 = arith.constant 0 : i32
    %c0_i32_0 = arith.constant 0 : i32
    %c0_i32_1 = arith.constant 0 : i32
    return %c0_i32, %c0_i32_0 : i32, i32
  }
  func.func @transform_3(%arg0: i32) -> (i32, i32) {
    %c0_i32 = arith.constant 0 : i32
    %c0_i32_0 = arith.constant 0 : i32
    %c0_i32_1 = arith.constant 0 : i32
    return %c0_i32, %c0_i32_0 : i32, i32
  }
  func.func @transform_4(%arg0: i32) -> (i32, i32) {
    %c0_i32 = arith.constant 0 : i32
    %c0_i32_0 = arith.constant 0 : i32
    %c0_i32_1 = arith.constant 0 : i32
    return %c0_i32, %c0_i32_0 : i32, i32
  }
  func.func @transform_5(%arg0: i32) -> (i32, i32) {
    %c0_i32 = arith.constant 0 : i32
    %c0_i32_0 = arith.constant 0 : i32
    %c0_i32_1 = arith.constant 0 : i32
    return %c0_i32, %c0_i32_0 : i32, i32
  }
  func.func @transform_6(%arg0: i32) -> (i32, i32) {
    %c0_i32 = arith.constant 0 : i32
    %c0_i32_0 = arith.constant 0 : i32
    %c0_i32_1 = arith.constant 0 : i32
    return %c0_i32, %c0_i32_0 : i32, i32
  }
  func.func @transform_7(%arg0: i32) -> (i32, i32) {
    %c0_i32 = arith.constant 0 : i32
    %c0_i32_0 = arith.constant 0 : i32
    return %arg0, %c0_i32 : i32, i32
  }
  func.func @transform_8(%arg0: i32) -> (i32, i32) {
    %c0_i32 = arith.constant 0 : i32
    %c0_i32_0 = arith.constant 0 : i32
    return %arg0, %c0_i32 : i32, i32
  }
  func.func @transform_9(%arg0: i32) -> (i32, i32) {
    %c0_i32 = arith.constant 0 : i32
    %c0_i32_0 = arith.constant 0 : i32
    %c0_i32_1 = arith.constant 0 : i32
    return %c0_i32, %c0_i32_0 : i32, i32
  }
}

</mosaic_0001>

<llo_original>
// kernel: tpu_custom_call.1
$region0: #{tpu_custom_call.1}
  #allocation0 [shape = 'u32[]', space=smem, size = 0x4, offset = 0x4, fixed_abs, tag = 'smem constant byte address 0x4 - core index']
  #allocation1 [shape = 'u32[144,128]{1,0:T(1,128)}', space=vmem, size = 0x12000, scoped, tag = 'internal scratch']
  %s0 = inlined_call_operand.hbm [shape: f32[512,128], index: 0, kind: input, shape index: {}]
  %s1 = inlined_call_operand.hbm [shape: f32[128,256], index: 1, kind: input, shape index: {}]
  %s2 = inlined_call_operand.vmem [shape: f32[1,256], index: 2, kind: input, shape index: {}]
  %s3 = inlined_call_operand.vmem [shape: f32[1,256], index: 3, kind: input, shape index: {}]
  %s4 = inlined_call_operand.vmem [shape: f32[1,256], index: 4, kind: input, shape index: {}]
  %s5 = inlined_call_operand.hbm [shape: f32[256,256], index: 5, kind: input, shape index: {}]
  %s6 = inlined_call_operand.vmem [shape: f32[1,256], index: 6, kind: input, shape index: {}]
  %s7 = inlined_call_operand.hbm [shape: f32[512,256], index: 7, kind: output, shape index: {0}]
  %s8 = inlined_call_operand.hbm [shape: f32[512,256], index: 8, kind: output, shape index: {1}]
  %s9 = inlined_call_operand.hbm [shape: f32[8,256], index: 9, kind: output, shape index: {2}]
  %10 = xla_tuple %s7, %s8, %s9
  %s11 = sld [smem:[#allocation0]]
  $region93: #{tpu_custom_call.1} parent=0
    _
  %s13 = ssub.s32 1, %s11
  %s14 = scalar_select 0, %s13, %s11
  $region1: #{tpu_custom_call.1} parent=0
    #allocation2 [shape = 'u8[131072]{0}', space=vmem, size = 0x20000, scoped, tag = 'input window, operand 0']
    #allocation3 [shape = 's32[2]{0}', space=sflag, size = 0x8, scoped, tag = 'scoped memory for tpu_custom_call.1']
    #allocation4 [shape = 's32[2]{0}', space=sflag, size = 0x8, scoped, tag = 'scoped memory for tpu_custom_call.1']
    #allocation5 [shape = 'u8[131072]{0}', space=vmem, size = 0x20000, scoped, tag = 'input window, operand 1, single buffered']
    #allocation6 [shape = 's32[1]{0}', space=sflag, size = 0x4, scoped, tag = 'scoped memory for tpu_custom_call.1']
    #allocation7 [shape = 'u8[262144]{0}', space=vmem, size = 0x40000, scoped, tag = 'input window, operand 5, single buffered']
    #allocation8 [shape = 'u8[262144]{0}', space=vmem, size = 0x40000, scoped, tag = 'output window, operand 0']
    #allocation9 [shape = 'u8[262144]{0}', space=vmem, size = 0x40000, scoped, tag = 'output window, operand 1']
    #allocation10 [shape = 's32[2]{0}', space=sflag, size = 0x8, scoped, tag = 'scoped memory for tpu_custom_call.1']
    #allocation11 [shape = 'u8[8192]{0}', space=vmem, size = 0x2000, scoped, tag = 'output window, operand 2, single buffered']
    %15 = vsyncpa [#allocation3], 0
    %s16 = scalar_lea.sflag [#allocation3], 1
    %17 = vsyncpa %s16, 0
    %18 = vsyncpa [#allocation6], 0
    %19 = vsyncpa [#allocation4], 0
    %s20 = scalar_lea.sflag [#allocation4], 1
    %21 = vsyncpa %s20, 0
    %22 = vsyncpa [#allocation10], 0
    %s23 = scalar_lea.sflag [#allocation10], 1
    %24 = vsyncpa %s23, 0
    loop: start=0, step=1, limit=6
    $region2: #{tpu_custom_call.1} parent=1 // loop_pre_header
      _
    $region3: #{tpu_custom_call.1} parent=1 // loop_header
      %s26 = sphi 0, %s30
      %p27 = scmp.ge.s32.totalorder %s26, 6
      %s36 = sphi 0, %s38
      %s39 = sphi 0, %s36
      %s40 = sphi 0, %s39
      %s56 = sphi 0, %s40
      %s60 = sphi 0, %s60
      %s62 = sphi 0, %s60
      %s63 = sphi 0, %s62
      %s77 = sphi 0, %s63
      %s81 = sphi 0, %s81
      %s83 = sphi 0, %s81
      %s84 = sphi 0, %s83
      %s98 = sphi 0, %s84
      %s102 = sphi 0, %s102
      %s104 = sphi 0, %s102
      %s105 = sphi 0, %s104
      %s119 = sphi 0, %s105
      %s123 = sphi 0, %s123
      %s125 = sphi 0, %s123
      %s126 = sphi 0, %s125
      %s140 = sphi 0, %s126
      %s144 = sphi 0, %s144
      %s146 = sphi 0, %s144
      %s147 = sphi 0, %s146
      %s161 = sphi 0, %s147
      %s165 = sphi 0, %s165
      %s167 = sphi 0, %s165
      %s168 = sphi 0, %s167
      %s182 = sphi 0, %s168
      %s188 = sphi 0, %s190
      %s191 = sphi 0, %s188
      %s192 = sphi 0, %s191
      %s208 = sphi 0, %s192
      %s214 = sphi 0, %s216
      %s217 = sphi 0, %s214
      %s218 = sphi 0, %s217
      %s234 = sphi 0, %s218
      %s238 = sphi 0, %s238
      %s240 = sphi 0, %s238
      %s241 = sphi 0, %s240
      %s255 = sphi 0, %s241
    $region4: #{tpu_custom_call.1} parent=1 // loop_header_branch
      %29 = sbr.rel (%p27) target = $region8
    $region5: #{tpu_custom_call.1} parent=1 // loop_body
      %s31 = ssub.s32 %s26, 1
      %s32 = ssub.s32 %s26, 2
      %s33 = sadd.s32 %s26, 1
      %s34 = ssub.s32 %s26, %s33
      %p35 = scmp.eq.s32.totalorder %s34, 0
      %s37 = sadd.s32 %s36, 1
      %s38 = scalar_select %p35, %s36, %s37
      %p41 = pneg %p35
      %p42 = scmp.eq.s32.totalorder %s26, 3
      %p43 = por %p41, %p42
      %p44 = scmp.ne.s32.totalorder %s36, %s39
      %p45 = scmp.eq.s32.totalorder %s26, 0
      %p46 = por %p44, %p45
      %p47 = scmp.ne.s32.totalorder %s36, %s39
      %p48 = scmp.eq.s32.totalorder %s31, 3
      %p49 = por %p47, %p48
      %p50 = scmp.ne.s32.totalorder %s39, %s40
      %p51 = scmp.eq.s32.totalorder %s31, 0
      %p52 = por %p50, %p51
      %p53 = scmp.ne.s32.totalorder %s39, %s40
      %p54 = scmp.eq.s32.totalorder %s32, 3
      %p55 = por %p53, %p54
      %p57 = scmp.ne.s32.totalorder %s40, %s56
      %p58 = scmp.eq.s32.totalorder %s32, 0
      %p59 = por %p57, %p58
      %s61 = sadd.s32 %s60, 1
      %p64 = scmp.eq.s32.totalorder %s26, 3
      %p65 = scmp.ne.s32.totalorder %s60, %s62
      %p66 = scmp.eq.s32.totalorder %s26, 0
      %p67 = por %p65, %p66
      %p68 = scmp.ne.s32.totalorder %s60, %s62
      %p69 = scmp.eq.s32.totalorder %s31, 3
      %p70 = por %p68, %p69
      %p71 = scmp.ne.s32.totalorder %s62, %s63
      %p72 = scmp.eq.s32.totalorder %s31, 0
      %p73 = por %p71, %p72
      %p74 = scmp.ne.s32.totalorder %s62, %s63
      %p75 = scmp.eq.s32.totalorder %s32, 3
      %p76 = por %p74, %p75
      %p78 = scmp.ne.s32.totalorder %s63, %s77
      %p79 = scmp.eq.s32.totalorder %s32, 0
      %p80 = por %p78, %p79
      %s82 = sadd.s32 %s81, 1
      %p85 = scmp.eq.s32.totalorder %s26, 3
      %p86 = scmp.ne.s32.totalorder %s81, %s83
      %p87 = scmp.eq.s32.totalorder %s26, 0
      %p88 = por %p86, %p87
      %p89 = scmp.ne.s32.totalorder %s81, %s83
      %p90 = scmp.eq.s32.totalorder %s31, 3
      %p91 = por %p89, %p90
      %p92 = scmp.ne.s32.totalorder %s83, %s84
      %p93 = scmp.eq.s32.totalorder %s31, 0
      %p94 = por %p92, %p93
      %p95 = scmp.ne.s32.totalorder %s83, %s84
      %p96 = scmp.eq.s32.totalorder %s32, 3
      %p97 = por %p95, %p96
      %p99 = scmp.ne.s32.totalorder %s84, %s98
      %p100 = scmp.eq.s32.totalorder %s32, 0
      %p101 = por %p99, %p100
      %s103 = sadd.s32 %s102, 1
      %p106 = scmp.eq.s32.totalorder %s26, 3
      %p107 = scmp.ne.s32.totalorder %s102, %s104
      %p108 = scmp.eq.s32.totalorder %s26, 0
      %p109 = por %p107, %p108
      %p110 = scmp.ne.s32.totalorder %s102, %s104
      %p111 = scmp.eq.s32.totalorder %s31, 3
      %p112 = por %p110, %p111
      %p113 = scmp.ne.s32.totalorder %s104, %s105
      %p114 = scmp.eq.s32.totalorder %s31, 0
      %p115 = por %p113, %p114
      %p116 = scmp.ne.s32.totalorder %s104, %s105
      %p117 = scmp.eq.s32.totalorder %s32, 3
      %p118 = por %p116, %p117
      %p120 = scmp.ne.s32.totalorder %s105, %s119
      %p121 = scmp.eq.s32.totalorder %s32, 0
      %p122 = por %p120, %p121
      %s124 = sadd.s32 %s123, 1
      %p127 = scmp.eq.s32.totalorder %s26, 3
      %p128 = scmp.ne.s32.totalorder %s123, %s125
      %p129 = scmp.eq.s32.totalorder %s26, 0
      %p130 = por %p128, %p129
      %p131 = scmp.ne.s32.totalorder %s123, %s125
      %p132 = scmp.eq.s32.totalorder %s31, 3
      %p133 = por %p131, %p132
      %p134 = scmp.ne.s32.totalorder %s125, %s126
      %p135 = scmp.eq.s32.totalorder %s31, 0
      %p136 = por %p134, %p135
      %p137 = scmp.ne.s32.totalorder %s125, %s126
      %p138 = scmp.eq.s32.totalorder %s32, 3
      %p139 = por %p137, %p138
      %p141 = scmp.ne.s32.totalorder %s126, %s140
      %p142 = scmp.eq.s32.totalorder %s32, 0
      %p143 = por %p141, %p142
      %s145 = sadd.s32 %s144, 1
      %p148 = scmp.eq.s32.totalorder %s26, 3
      %p149 = scmp.ne.s32.totalorder %s144, %s146
      %p150 = scmp.eq.s32.totalorder %s26, 0
      %p151 = por %p149, %p150
      %p152 = scmp.ne.s32.totalorder %s144, %s146
      %p153 = scmp.eq.s32.totalorder %s31, 3
      %p154 = por %p152, %p153
      %p155 = scmp.ne.s32.totalorder %s146, %s147
      %p156 = scmp.eq.s32.totalorder %s31, 0
      %p157 = por %p155, %p156
      %p158 = scmp.ne.s32.totalorder %s146, %s147
      %p159 = scmp.eq.s32.totalorder %s32, 3
      %p160 = por %p158, %p159
      %p162 = scmp.ne.s32.totalorder %s147, %s161
      %p163 = scmp.eq.s32.totalorder %s32, 0
      %p164 = por %p162, %p163
      %s166 = sadd.s32 %s165, 1
      %p169 = scmp.eq.s32.totalorder %s26, 3
      %p170 = scmp.ne.s32.totalorder %s165, %s167
      %p171 = scmp.eq.s32.totalorder %s26, 0
      %p172 = por %p170, %p171
      %p173 = scmp.ne.s32.totalorder %s165, %s167
      %p174 = scmp.eq.s32.totalorder %s31, 3
      %p175 = por %p173, %p174
      %p176 = scmp.ne.s32.totalorder %s167, %s168
      %p177 = scmp.eq.s32.totalorder %s31, 0
      %p178 = por %p176, %p177
      %p179 = scmp.ne.s32.totalorder %s167, %s168
      %p180 = scmp.eq.s32.totalorder %s32, 3
      %p181 = por %p179, %p180
      %p183 = scmp.ne.s32.totalorder %s168, %s182
      %p184 = scmp.eq.s32.totalorder %s32, 0
      %p185 = por %p183, %p184
      %s186 = ssub.s32 %s26, %s33
      %p187 = scmp.eq.s32.totalorder %s186, 0
      %s189 = sadd.s32 %s188, 1
      %s190 = scalar_select %p187, %s188, %s189
      %p193 = pneg %p187
      %p194 = scmp.eq.s32.totalorder %s26, 3
      %p195 = por %p193, %p194
      %p196 = scmp.ne.s32.totalorder %s188, %s191
      %p197 = scmp.eq.s32.totalorder %s26, 0
      %p198 = por %p196, %p197
      %p199 = scmp.ne.s32.totalorder %s188, %s191
      %p200 = scmp.eq.s32.totalorder %s31, 3
      %p201 = por %p199, %p200
      %p202 = scmp.ne.s32.totalorder %s191, %s192
      %p203 = scmp.eq.s32.totalorder %s31, 0
      %p204 = por %p202, %p203
      %p205 = scmp.ne.s32.totalorder %s191, %s192
      %p206 = scmp.eq.s32.totalorder %s32, 3
      %p207 = por %p205, %p206
      %p209 = scmp.ne.s32.totalorder %s192, %s208
      %p210 = scmp.eq.s32.totalorder %s32, 0
      %p211 = por %p209, %p210
      %s212 = ssub.s32 %s26, %s33
      %p213 = scmp.eq.s32.totalorder %s212, 0
      %s215 = sadd.s32 %s214, 1
      %s216 = scalar_select %p213, %s214, %s215
      %p219 = pneg %p213
      %p220 = scmp.eq.s32.totalorder %s26, 3
      %p221 = por %p219, %p220
      %p222 = scmp.ne.s32.totalorder %s214, %s217
      %p223 = scmp.eq.s32.totalorder %s26, 0
      %p224 = por %p222, %p223
      %p225 = scmp.ne.s32.totalorder %s214, %s217
      %p226 = scmp.eq.s32.totalorder %s31, 3
      %p227 = por %p225, %p226
      %p228 = scmp.ne.s32.totalorder %s217, %s218
      %p229 = scmp.eq.s32.totalorder %s31, 0
      %p230 = por %p228, %p229
      %p231 = scmp.ne.s32.totalorder %s217, %s218
      %p232 = scmp.eq.s32.totalorder %s32, 3
      %p233 = por %p231, %p232
      %p235 = scmp.ne.s32.totalorder %s218, %s234
      %p236 = scmp.eq.s32.totalorder %s32, 0
      %p237 = por %p235, %p236
      %s239 = sadd.s32 %s238, 1
      %p242 = scmp.eq.s32.totalorder %s26, 3
      %p243 = scmp.ne.s32.totalorder %s238, %s240
      %p244 = scmp.eq.s32.totalorder %s26, 0
      %p245 = por %p243, %p244
      %p246 = scmp.ne.s32.totalorder %s238, %s240
      %p247 = scmp.eq.s32.totalorder %s31, 3
      %p248 = por %p246, %p247
      %p249 = scmp.ne.s32.totalorder %s240, %s241
      %p250 = scmp.eq.s32.totalorder %s31, 0
      %p251 = por %p249, %p250
      %p252 = scmp.ne.s32.totalorder %s240, %s241
      %p253 = scmp.eq.s32.totalorder %s32, 3
      %p254 = por %p252, %p253
      %p256 = scmp.ne.s32.totalorder %s241, %s255
      %p257 = scmp.eq.s32.totalorder %s32, 0
      %p258 = por %p256, %p257
      %p259 = scmp.le.s32.totalorder 1, %s26
      %p260 = scmp.lt.s32.totalorder %s26, 5
      %p261 = pnand %p259, %p260
      %p262 = pneg %p261
      // Predicated region
      $region9: #{tpu_custom_call.1} parent=5 // pred_check
        _
      $region10: #{tpu_custom_call.1} parent=5 // pred_check_branch
        %264 = sbr.rel (%p261) target = $region12
      $region11: #{tpu_custom_call.1} parent=5 // pred_region
        %s265 = ssub.s32 %s26, 1
        // Predicated region
        $region13: #{tpu_custom_call.1} parent=11 // pred_check
          %p266 = pneg %p73
        $region14: #{tpu_custom_call.1} parent=11 // pred_check_branch
          %268 = sbr.rel (%p266) target = $region16
        $region15: #{tpu_custom_call.1} parent=11 // pred_region
          %s270 = ssub.s32 4096, 4096
          %271 = vsyncadd [#allocation6], %s270
          %s272 = sshll.u32 [#allocation5], 4
          %s273 = int_to_ptr.vmem [resolvable:$true] %s272
          %278 = dma.hbm_to_vmem [thread:$0]  %s1, 4096, %s273, [#allocation6], 256, 256, 16
        $region16: #{tpu_custom_call.1} parent=11 // pred_fallthru
          _
        // Predicated region
        $region17: #{tpu_custom_call.1} parent=11 // pred_check
          %p279 = pneg %p94
        $region18: #{tpu_custom_call.1} parent=11 // pred_check_branch
          %281 = sbr.rel (%p279) target = $region20
        $region19: #{tpu_custom_call.1} parent=11 // pred_region
          _
        $region20: #{tpu_custom_call.1} parent=11 // pred_fallthru
          _
        // Predicated region
        $region21: #{tpu_custom_call.1} parent=11 // pred_check
          %p282 = pneg %p115
        $region22: #{tpu_custom_call.1} parent=11 // pred_check_branch
          %284 = sbr.rel (%p282) target = $region24
        $region23: #{tpu_custom_call.1} parent=11 // pred_region
          _
        $region24: #{tpu_custom_call.1} parent=11 // pred_fallthru
          _
        // Predicated region
        $region25: #{tpu_custom_call.1} parent=11 // pred_check
          %p285 = pneg %p136
        $region26: #{tpu_custom_call.1} parent=11 // pred_check_branch
          %287 = sbr.rel (%p285) target = $region28
        $region27: #{tpu_custom_call.1} parent=11 // pred_region
          _
        $region28: #{tpu_custom_call.1} parent=11 // pred_fallthru
          _
        // Predicated region
        $region29: #{tpu_custom_call.1} parent=11 // pred_check
          %p288 = pneg %p157
        $region30: #{tpu_custom_call.1} parent=11 // pred_check_branch
          %290 = sbr.rel (%p288) target = $region32
        $region31: #{tpu_custom_call.1} parent=11 // pred_region
          %s292 = ssub.s32 8192, 8192
          %293 = vsyncadd [#allocation6], %s292
          %s294 = sshll.u32 [#allocation7], 4
          %s295 = int_to_ptr.vmem [resolvable:$true] %s294
          %300 = dma.hbm_to_vmem [thread:$0]  %s5, 8192, %s295, [#allocation6], 256, 256, 16
        $region32: #{tpu_custom_call.1} parent=11 // pred_fallthru
          _
        // Predicated region
        $region33: #{tpu_custom_call.1} parent=11 // pred_check
          %p301 = pneg %p178
        $region34: #{tpu_custom_call.1} parent=11 // pred_check_branch
          %303 = sbr.rel (%p301) target = $region36
        $region35: #{tpu_custom_call.1} parent=11 // pred_region
          _
        $region36: #{tpu_custom_call.1} parent=11 // pred_fallthru
          _
      $region12: #{tpu_custom_call.1} parent=5 // pred_fallthru
        _
      %p304 = scmp.lt.s32.totalorder %s26, 4
      // Predicated region
      $region37: #{tpu_custom_call.1} parent=5 // pred_check
        %p305 = pneg %p304
      $region38: #{tpu_custom_call.1} parent=5 // pred_check_branch
        %307 = sbr.rel (%p305) target = $region40
      $region39: #{tpu_custom_call.1} parent=5 // pred_region
        // Predicated region
        $region41: #{tpu_custom_call.1} parent=39 // pred_check
          %p308 = pneg %p46
        $region42: #{tpu_custom_call.1} parent=39 // pred_check_branch
          %310 = sbr.rel (%p308) target = $region44
        $region43: #{tpu_custom_call.1} parent=39 // pred_region
          %s311 = sand.u32 %s36, 1
          %s312 = scalar_lea.sflag [#allocation3], %s311
          %s313 = sand.u32 %s36, 1
          %s314 = smul.addr %s313, 128
          %s315 = scalar_lea.vmem [#allocation2], %s314
          %s316 = smul.u32 16, %s26
          %s318 = ssub.s32 2048, 2048
          %319 = vsyncadd %s312, %s318
          %s320 = smul.addr %s316, 128
          %s321 = scalar_lea.hbm %s0, %s320
          %s322 = sshll.u32 %s315, 4
          %s323 = int_to_ptr.vmem [resolvable:$true] %s322
          %328 = dma.hbm_to_vmem [thread:$0]  %s321, 2048, %s323, %s312, 128, 128, 8
        $region44: #{tpu_custom_call.1} parent=39 // pred_fallthru
          _
      $region40: #{tpu_custom_call.1} parent=5 // pred_fallthru
        _
      %p329 = scmp.le.s32.totalorder 1, %s26
      %p330 = scmp.lt.s32.totalorder %s26, 5
      %p331 = pnand %p329, %p330
      %p332 = pneg %p331
      // Predicated region
      $region45: #{tpu_custom_call.1} parent=5 // pred_check
        _
      $region46: #{tpu_custom_call.1} parent=5 // pred_check_branch
        %334 = sbr.rel (%p331) target = $region48
      $region47: #{tpu_custom_call.1} parent=5 // pred_region
        %s335 = ssub.s32 %s26, 1
        %s336 = sand.u32 %s39, 1
        %s337 = scalar_lea.sflag [#allocation3], %s336
        %s338 = sand.u32 %s39, 1
        %s339 = smul.addr %s338, 128
        %s340 = scalar_lea.vmem [#allocation2], %s339
        // Predicated region
        $region49: #{tpu_custom_call.1} parent=47 // pred_check
          %p341 = pneg %p52
        $region50: #{tpu_custom_call.1} parent=47 // pred_check_branch
          %343 = sbr.rel (%p341) target = $region52
        $region51: #{tpu_custom_call.1} parent=47 // pred_region
          %344 = dma.done %s337, 2048
        $region52: #{tpu_custom_call.1} parent=47 // pred_fallthru
          _
        // Predicated region
        $region53: #{tpu_custom_call.1} parent=47 // pred_check
          %p345 = pneg %p73
        $region54: #{tpu_custom_call.1} parent=47 // pred_check_branch
          %347 = sbr.rel (%p345) target = $region56
        $region55: #{tpu_custom_call.1} parent=47 // pred_region
          %348 = dma.done [#allocation6], 4096
        $region56: #{tpu_custom_call.1} parent=47 // pred_fallthru
          _
        // Predicated region
        $region57: #{tpu_custom_call.1} parent=47 // pred_check
          %p349 = pneg %p157
        $region58: #{tpu_custom_call.1} parent=47 // pred_check_branch
          %351 = sbr.rel (%p349) target = $region60
        $region59: #{tpu_custom_call.1} parent=47 // pred_region
          %352 = dma.done [#allocation6], 8192
        $region60: #{tpu_custom_call.1} parent=47 // pred_fallthru
          _
        %s353 = sand.u32 %s39, 1
        %s354 = scalar_lea.sflag [#allocation3], %s353
        %s355 = sand.u32 %s39, 1
        %s356 = smul.addr %s355, 128
        %s357 = scalar_lea.vmem [#allocation2], %s356
        %p358 = pneg %p52
        %p359 = pneg %p49
        %p360 = pneg %p73
        %p361 = pneg %p70
        %p362 = pneg %p94
        %p363 = pneg %p91
        %p364 = pneg %p115
        %p365 = pneg %p112
        %p366 = pneg %p136
        %p367 = pneg %p133
        %p368 = pneg %p157
        %p369 = pneg %p154
        %p370 = pneg %p178
        %p371 = pneg %p175
        %p372 = pneg %p204
        %p373 = pneg %p201
        %s374 = sand.u32 %s191, 1
        %s375 = scalar_lea.sflag [#allocation4], %s374
        %s376 = sand.u32 %s191, 1
        %s377 = smul.addr %s376, 256
        %s378 = scalar_lea.vmem [#allocation8], %s377
        %p379 = pneg %p230
        %p380 = pneg %p227
        %s381 = sand.u32 %s31, 1
        %s382 = scalar_lea.sflag [#allocation10], %s381
        %s383 = sand.u32 %s217, 1
        %s384 = smul.addr %s383, 256
        %s385 = scalar_lea.vmem [#allocation9], %s384
        %p386 = pneg %p251
        %p387 = pneg %p248
        %s388 = smul.u32 16, %s31
        %s389 = smul.u32 16, %s31
        %s390 = smul.u32 16, %s31
        %p391 = scmp.eq.s32.totalorder %s31, 0
        // Predicated region
        $region61: #{tpu_custom_call.1} parent=47 // pred_check
          %p392 = pneg %p391
        $region62: #{tpu_custom_call.1} parent=47 // pred_check_branch
          %394 = sbr.rel (%p392) target = $region64
        $region63: #{tpu_custom_call.1} parent=47 // pred_region
          %395 = vst [vmem:[#allocation11] sm:$0xff] 0.0
          %396 = vst [vmem:[#allocation11 + $0x8] sm:$0xff] 0.0
        $region64: #{tpu_custom_call.1} parent=47 // pred_fallthru
          _
        %v397 = vld [vmem:[%s340] sm:$0xff]
        %v398 = vld [vmem:[%s340 + $0x8] sm:$0xff]
        %v399 = vld [vmem:[%s340 + $0x10] sm:$0xff]
        %v400 = vld [vmem:[%s340 + $0x18] sm:$0xff]
        %v401 = vld [vmem:[%s340 + $0x20] sm:$0xff]
        %v402 = vld [vmem:[%s340 + $0x28] sm:$0xff]
        %v403 = vld [vmem:[%s340 + $0x30] sm:$0xff]
        %v404 = vld [vmem:[%s340 + $0x38] sm:$0xff]
        %v405 = vld [vmem:[%s340 + $0x40] sm:$0xff]
        %v406 = vld [vmem:[%s340 + $0x48] sm:$0xff]
        %v407 = vld [vmem:[%s340 + $0x50] sm:$0xff]
        %v408 = vld [vmem:[%s340 + $0x58] sm:$0xff]
        %v409 = vld [vmem:[%s340 + $0x60] sm:$0xff]
        %v410 = vld [vmem:[%s340 + $0x68] sm:$0xff]
        %v411 = vld [vmem:[%s340 + $0x70] sm:$0xff]
        %v412 = vld [vmem:[%s340 + $0x78] sm:$0xff]
        %v413 = vld [vmem:[#allocation5] sm:$0xff]
        %v414 = vld [vmem:[#allocation5 + $0x8] sm:$0xff]
        %v415 = vld [vmem:[#allocation5 + $0x10] sm:$0xff]
        %v416 = vld [vmem:[#allocation5 + $0x18] sm:$0xff]
        %v417 = vld [vmem:[#allocation5 + $0x20] sm:$0xff]
        %v418 = vld [vmem:[#allocation5 + $0x28] sm:$0xff]
        %v419 = vld [vmem:[#allocation5 + $0x30] sm:$0xff]
        %v420 = vld [vmem:[#allocation5 + $0x38] sm:$0xff]
        %v421 = vld [vmem:[#allocation5 + $0x40] sm:$0xff]
        %v422 = vld [vmem:[#allocation5 + $0x48] sm:$0xff]
        %v423 = vld [vmem:[#allocation5 + $0x50] sm:$0xff]
        %v424 = vld [vmem:[#allocation5 + $0x58] sm:$0xff]
        %v425 = vld [vmem:[#allocation5 + $0x60] sm:$0xff]
        %v426 = vld [vmem:[#allocation5 + $0x68] sm:$0xff]
        %v427 = vld [vmem:[#allocation5 + $0x70] sm:$0xff]
        %v428 = vld [vmem:[#allocation5 + $0x78] sm:$0xff]
        %v429 = vld [vmem:[#allocation5 + $0x80] sm:$0xff]
        %v430 = vld [vmem:[#allocation5 + $0x88] sm:$0xff]
        %v431 = vld [vmem:[#allocation5 + $0x90] sm:$0xff]
        %v432 = vld [vmem:[#allocation5 + $0x98] sm:$0xff]
        %v433 = vld [vmem:[#allocation5 + $0xa0] sm:$0xff]
        %v434 = vld [vmem:[#allocation5 + $0xa8] sm:$0xff]
        %v435 = vld [vmem:[#allocation5 + $0xb0] sm:$0xff]
        %v436 = vld [vmem:[#allocation5 + $0xb8] sm:$0xff]
        %v437 = vld [vmem:[#allocation5 + $0xc0] sm:$0xff]
        %v438 = vld [vmem:[#allocation5 + $0xc8] sm:$0xff]
        %v439 = vld [vmem:[#allocation5 + $0xd0] sm:$0xff]
        %v440 = vld [vmem:[#allocation5 + $0xd8] sm:$0xff]
        %v441 = vld [vmem:[#allocation5 + $0xe0] sm:$0xff]
        %v442 = vld [vmem:[#allocation5 + $0xe8] sm:$0xff]
        %v443 = vld [vmem:[#allocation5 + $0xf0] sm:$0xff]
        %v444 = vld [vmem:[#allocation5 + $0xf8] sm:$0xff]
        %v445 = vld [vmem:[%s2] sm:$0x3]
        %v447 = vlaneseq
        %v448 = vshrl.u32 %v447, 7
        %v449 = vsub.s32 0, %v448
        %v450 = vrot.slane %v445, %v449
        %v451 = vlaneseq
        %v452 = vshrl.u32 %v451, 7
        %v453 = vsub.s32 1, %v452
        %v454 = vrot.slane %v445, %v453
        %457 = vmatprep.subr.mxu0 %v414
        %458 = vmatpush1.msra.mxu0 %v413
        %459 = vmatprep.subr.mxu0 %v416
        %460 = vmatpush1.msra.mxu0 %v415
        %461 = vmatprep.subr.mxu0 %v418
        %462 = vmatpush1.msra.mxu0 %v417
        %463 = vmatprep.subr.mxu0 %v420
        %464 = vmatpush1.msra.mxu0 %v419
        %465 = vmatprep.subr.mxu0 %v422
        %466 = vmatpush1.msra.mxu0 %v421
        %467 = vmatprep.subr.mxu0 %v424
        %468 = vmatpush1.msra.mxu0 %v423
        %469 = vmatprep.subr.mxu0 %v426
        %470 = vmatpush1.msra.mxu0 %v425
        %471 = vmatprep.subr.mxu0 %v428
        %472 = vmatpush1.msra.mxu0 %v427
        %473 = vmatprep.subr.mxu0 %v430
        %474 = vmatpush1.msra.mxu0 %v429
        %475 = vmatprep.subr.mxu0 %v432
        %476 = vmatpush1.msra.mxu0 %v431
        %477 = vmatprep.subr.mxu0 %v434
        %478 = vmatpush1.msra.mxu0 %v433
        %479 = vmatprep.subr.mxu0 %v436
        %480 = vmatpush1.msra.mxu0 %v435
        %481 = vmatprep.subr.mxu0 %v438
        %482 = vmatpush1.msra.mxu0 %v437
        %483 = vmatprep.subr.mxu0 %v440
        %484 = vmatpush1.msra.mxu0 %v439
        %485 = vmatprep.subr.mxu0 %v442
        %486 = vmatpush1.msra.mxu0 %v441
        %487 = vmatprep.subr.mxu0 %v444
        %488 = vmatpush1.msra.mxu0 %v443
        %489 = vmatprep.subr.mxu0 0.0
        %490 = vmatpush1.msra.mxu0 0.0
        %491 = vmatprep.subr.mxu0 0.0
        %492 = vmatpush1.msra.mxu0 0.0
        %493 = vmatprep.subr.mxu0 0.0
        %494 = vmatpush1.msra.mxu0 0.0
        %495 = vmatprep.subr.mxu0 0.0
        %496 = vmatpush1.msra.mxu0 0.0
        %497 = vmatprep.subr.mxu0 0.0
        %498 = vmatpush1.msra.mxu0 0.0
        %499 = vmatprep.subr.mxu0 0.0
        %500 = vmatpush1.msra.mxu0 0.0
        %501 = vmatprep.subr.mxu0 0.0
        %502 = vmatpush1.msra.mxu0 0.0
        %503 = vmatprep.subr.mxu0 0.0
        %504 = vmatpush1.msra.mxu0 0.0
        %505 = vmatprep.subr.mxu0 0.0
        %506 = vmatpush1.msra.mxu0 0.0
        %507 = vmatprep.subr.mxu0 0.0
        %508 = vmatpush1.msra.mxu0 0.0
        %509 = vmatprep.subr.mxu0 0.0
        %510 = vmatpush1.msra.mxu0 0.0
        %511 = vmatprep.subr.mxu0 0.0
        %512 = vmatpush1.msra.mxu0 0.0
        %513 = vmatprep.subr.mxu0 0.0
        %514 = vmatpush1.msra.mxu0 0.0
        %515 = vmatprep.subr.mxu0 0.0
        %516 = vmatpush1.msra.mxu0 0.0
        %517 = vmatprep.subr.mxu0 0.0
        %518 = vmatpush1.msra.mxu0 0.0
        %519 = vmatprep.subr.mxu0 0.0
        %520 = vmatpush1.msra.mxu0 0.0
        %521 = vmatprep.mubr.f32.mxu0 0.0
        %522 = vmatmul.mubr.f32.gmra.mrb[0].mxu0 %v397
        %v523 = vpop.f32.mrb[0].mxu0
        %v524 = vadd.f32 %v450, %v523
        %v525 = vpop.f32.mrb[0].mxu0
        %v526 = vadd.f32 %v454, %v525
        %527 = vmatprep.mubr.f32.mxu0 0.0
        %528 = vmatmul.mubr.f32.gmra.mrb[0].mxu0 %v398
        %v529 = vpop.f32.mrb[0].mxu0
        %v530 = vadd.f32 %v450, %v529
        %v531 = vpop.f32.mrb[0].mxu0
        %v532 = vadd.f32 %v454, %v531
        %533 = vmatprep.mubr.f32.mxu0 0.0
        %534 = vmatmul.mubr.f32.gmra.mrb[0].mxu0 %v399
        %v535 = vpop.f32.mrb[0].mxu0
        %v536 = vadd.f32 %v450, %v535
        %v537 = vpop.f32.mrb[0].mxu0
        %v538 = vadd.f32 %v454, %v537
        %539 = vmatprep.mubr.f32.mxu0 0.0
        %540 = vmatmul.mubr.f32.gmra.mrb[0].mxu0 %v400
        %v541 = vpop.f32.mrb[0].mxu0
        %v542 = vadd.f32 %v450, %v541
        %v543 = vpop.f32.mrb[0].mxu0
        %v544 = vadd.f32 %v454, %v543
        %545 = vmatprep.mubr.f32.mxu0 0.0
        %546 = vmatmul.mubr.f32.gmra.mrb[0].mxu0 %v401
        %v547 = vpop.f32.mrb[0].mxu0
        %v548 = vadd.f32 %v450, %v547
        %v549 = vpop.f32.mrb[0].mxu0
        %v550 = vadd.f32 %v454, %v549
        %551 = vmatprep.mubr.f32.mxu0 0.0
        %552 = vmatmul.mubr.f32.gmra.mrb[0].mxu0 %v402
        %v553 = vpop.f32.mrb[0].mxu0
        %v554 = vadd.f32 %v450, %v553
        %v555 = vpop.f32.mrb[0].mxu0
        %v556 = vadd.f32 %v454, %v555
        %557 = vmatprep.mubr.f32.mxu0 0.0
        %558 = vmatmul.mubr.f32.gmra.mrb[0].mxu0 %v403
        %v559 = vpop.f32.mrb[0].mxu0
        %v560 = vadd.f32 %v450, %v559
        %v561 = vpop.f32.mrb[0].mxu0
        %v562 = vadd.f32 %v454, %v561
        %563 = vmatprep.mubr.f32.mxu0 0.0
        %564 = vmatmul.mubr.f32.gmra.mrb[0].mxu0 %v404
        %v565 = vpop.f32.mrb[0].mxu0
        %v566 = vadd.f32 %v450, %v565
        %v567 = vpop.f32.mrb[0].mxu0
        %v568 = vadd.f32 %v454, %v567
        %569 = vmatprep.mubr.f32.mxu0 0.0
        %570 = vmatmul.mubr.f32.gmra.mrb[0].mxu0 %v405
        %v571 = vpop.f32.mrb[0].mxu0
        %v572 = vadd.f32 %v450, %v571
        %v573 = vpop.f32.mrb[0].mxu0
        %v574 = vadd.f32 %v454, %v573
        %575 = vmatprep.mubr.f32.mxu0 0.0
        %576 = vmatmul.mubr.f32.gmra.mrb[0].mxu0 %v406
        %v577 = vpop.f32.mrb[0].mxu0
        %v578 = vadd.f32 %v450, %v577
        %v579 = vpop.f32.mrb[0].mxu0
        %v580 = vadd.f32 %v454, %v579
        %581 = vmatprep.mubr.f32.mxu0 0.0
        %582 = vmatmul.mubr.f32.gmra.mrb[0].mxu0 %v407
        %v583 = vpop.f32.mrb[0].mxu0
        %v584 = vadd.f32 %v450, %v583
        %v585 = vpop.f32.mrb[0].mxu0
        %v586 = vadd.f32 %v454, %v585
        %587 = vmatprep.mubr.f32.mxu0 0.0
        %588 = vmatmul.mubr.f32.gmra.mrb[0].mxu0 %v408
        %v589 = vpop.f32.mrb[0].mxu0
        %v590 = vadd.f32 %v450, %v589
        %v591 = vpop.f32.mrb[0].mxu0
        %v592 = vadd.f32 %v454, %v591
        %593 = vmatprep.mubr.f32.mxu0 0.0
        %594 = vmatmul.mubr.f32.gmra.mrb[0].mxu0 %v409
        %v595 = vpop.f32.mrb[0].mxu0
        %v596 = vadd.f32 %v450, %v595
        %v597 = vpop.f32.mrb[0].mxu0
        %v598 = vadd.f32 %v454, %v597
        %599 = vmatprep.mubr.f32.mxu0 0.0
        %600 = vmatmul.mubr.f32.gmra.mrb[0].mxu0 %v410
        %v601 = vpop.f32.mrb[0].mxu0
        %v602 = vadd.f32 %v450, %v601
        %v603 = vpop.f32.mrb[0].mxu0
        %v604 = vadd.f32 %v454, %v603
        %605 = vmatprep.mubr.f32.mxu0 0.0
        %606 = vmatmul.mubr.f32.gmra.mrb[0].mxu0 %v411
        %v607 = vpop.f32.mrb[0].mxu0
        %v608 = vadd.f32 %v450, %v607
        %v609 = vpop.f32.mrb[0].mxu0
        %v610 = vadd.f32 %v454, %v609
        %611 = vmatprep.mubr.f32.mxu0 0.0
        %612 = vmatmul.mubr.f32.gmra.mrb[0].mxu0 %v412
        %v613 = vpop.f32.mrb[0].mxu0
        %v614 = vadd.f32 %v450, %v613
        %v615 = vpop.f32.mrb[0].mxu0
        %v616 = vadd.f32 %v454, %v615
        %617 = vdwg.mxu0
        %v618 = vadd.f32 %v524, %v526
        %619 = vadd.xlane.f32.xlu0 %v618
        %v620 = vpop.xlane.xlu0 %619
        %v621 = vadd.f32 %v530, %v532
        %622 = vadd.xlane.f32.xlu0 %v621
        %v623 = vpop.xlane.xlu0 %622
        %v624 = vadd.f32 %v536, %v538
        %625 = vadd.xlane.f32.xlu0 %v624
        %v626 = vpop.xlane.xlu0 %625
        %v627 = vadd.f32 %v542, %v544
        %628 = vadd.xlane.f32.xlu0 %v627
        %v629 = vpop.xlane.xlu0 %628
        %v630 = vadd.f32 %v548, %v550
        %631 = vadd.xlane.f32.xlu0 %v630
        %v632 = vpop.xlane.xlu0 %631
        %v633 = vadd.f32 %v554, %v556
        %634 = vadd.xlane.f32.xlu0 %v633
        %v635 = vpop.xlane.xlu0 %634
        %v636 = vadd.f32 %v560, %v562
        %637 = vadd.xlane.f32.xlu0 %v636
        %v638 = vpop.xlane.xlu0 %637
        %v639 = vadd.f32 %v566, %v568
        %640 = vadd.xlane.f32.xlu0 %v639
        %v641 = vpop.xlane.xlu0 %640
        %v642 = vadd.f32 %v572, %v574
        %643 = vadd.xlane.f32.xlu0 %v642
        %v644 = vpop.xlane.xlu0 %643
        %v645 = vadd.f32 %v578, %v580
        %646 = vadd.xlane.f32.xlu0 %v645
        %v647 = vpop.xlane.xlu0 %646
        %v648 = vadd.f32 %v584, %v586
        %649 = vadd.xlane.f32.xlu0 %v648
        %v650 = vpop.xlane.xlu0 %649
        %v651 = vadd.f32 %v590, %v592
        %652 = vadd.xlane.f32.xlu0 %v651
        %v653 = vpop.xlane.xlu0 %652
        %v654 = vadd.f32 %v596, %v598
        %655 = vadd.xlane.f32.xlu0 %v654
        %v656 = vpop.xlane.xlu0 %655
        %v657 = vadd.f32 %v602, %v604
        %658 = vadd.xlane.f32.xlu0 %v657
        %v659 = vpop.xlane.xlu0 %658
        %v660 = vadd.f32 %v608, %v610
        %661 = vadd.xlane.f32.xlu0 %v660
        %v662 = vpop.xlane.xlu0 %661
        %v663 = vadd.f32 %v614, %v616
        %664 = vadd.xlane.f32.xlu0 %v663
        %v665 = vpop.xlane.xlu0 %664
        %v666 = vrcp.pop 256.0
        %v667 = vmul.f32 %v620, %v666
        %v668 = vmul.f32 %v623, %v666
        %v669 = vmul.f32 %v626, %v666
        %v670 = vmul.f32 %v629, %v666
        %v671 = vmul.f32 %v632, %v666
        %v672 = vmul.f32 %v635, %v666
        %v673 = vmul.f32 %v638, %v666
        %v674 = vmul.f32 %v641, %v666
        %v675 = vmul.f32 %v644, %v666
        %v676 = vmul.f32 %v647, %v666
        %v677 = vmul.f32 %v650, %v666
        %v678 = vmul.f32 %v653, %v666
        %v679 = vmul.f32 %v656, %v666
        %v680 = vmul.f32 %v659, %v666
        %v681 = vmul.f32 %v662, %v666
        %v682 = vmul.f32 %v665, %v666
        %v683 = vsub.f32 %v524, %v667
        %v684 = vsub.f32 %v526, %v667
        %v685 = vsub.f32 %v530, %v668
        %v686 = vsub.f32 %v532, %v668
        %v687 = vsub.f32 %v536, %v669
        %v688 = vsub.f32 %v538, %v669
        %v689 = vsub.f32 %v542, %v670
        %v690 = vsub.f32 %v544, %v670
        %v691 = vsub.f32 %v548, %v671
        %v692 = vsub.f32 %v550, %v671
        %v693 = vsub.f32 %v554, %v672
        %v694 = vsub.f32 %v556, %v672
        %v695 = vsub.f32 %v560, %v673
        %v696 = vsub.f32 %v562, %v673
        %v697 = vsub.f32 %v566, %v674
        %v698 = vsub.f32 %v568, %v674
        %v699 = vsub.f32 %v572, %v675
        %v700 = vsub.f32 %v574, %v675
        %v701 = vsub.f32 %v578, %v676
        %v702 = vsub.f32 %v580, %v676
        %v703 = vsub.f32 %v584, %v677
        %v704 = vsub.f32 %v586, %v677
        %v705 = vsub.f32 %v590, %v678
        %v706 = vsub.f32 %v592, %v678
        %v707 = vsub.f32 %v596, %v679
        %v708 = vsub.f32 %v598, %v679
        %v709 = vsub.f32 %v602, %v680
        %v710 = vsub.f32 %v604, %v680
        %v711 = vsub.f32 %v608, %v681
        %v712 = vsub.f32 %v610, %v681
        %v713 = vsub.f32 %v614, %v682
        %v714 = vsub.f32 %v616, %v682
        %v715 = vmul.f32 %v683, %v683
        %v716 = vmul.f32 %v684, %v684
        %v717 = vmul.f32 %v685, %v685
        %v718 = vmul.f32 %v686, %v686
        %v719 = vmul.f32 %v687, %v687
        %v720 = vmul.f32 %v688, %v688
        %v721 = vmul.f32 %v689, %v689
        %v722 = vmul.f32 %v690, %v690
        %v723 = vmul.f32 %v691, %v691
        %v724 = vmul.f32 %v692, %v692
        %v725 = vmul.f32 %v693, %v693
        %v726 = vmul.f32 %v694, %v694
        %v727 = vmul.f32 %v695, %v695
        %v728 = vmul.f32 %v696, %v696
        %v729 = vmul.f32 %v697, %v697
        %v730 = vmul.f32 %v698, %v698
        %v731 = vmul.f32 %v699, %v699
        %v732 = vmul.f32 %v700, %v700
        %v733 = vmul.f32 %v701, %v701
        %v734 = vmul.f32 %v702, %v702
        %v735 = vmul.f32 %v703, %v703
        %v736 = vmul.f32 %v704, %v704
        %v737 = vmul.f32 %v705, %v705
        %v738 = vmul.f32 %v706, %v706
        %v739 = vmul.f32 %v707, %v707
        %v740 = vmul.f32 %v708, %v708
        %v741 = vmul.f32 %v709, %v709
        %v742 = vmul.f32 %v710, %v710
        %v743 = vmul.f32 %v711, %v711
        %v744 = vmul.f32 %v712, %v712
        %v745 = vmul.f32 %v713, %v713
        %v746 = vmul.f32 %v714, %v714
        %v747 = vadd.f32 %v715, %v716
        %748 = vadd.xlane.f32.xlu0 %v747
        %v749 = vpop.xlane.xlu0 %748
        %v750 = vadd.f32 %v717, %v718
        %751 = vadd.xlane.f32.xlu0 %v750
        %v752 = vpop.xlane.xlu0 %751
        %v753 = vadd.f32 %v719, %v720
        %754 = vadd.xlane.f32.xlu0 %v753
        %v755 = vpop.xlane.xlu0 %754
        %v756 = vadd.f32 %v721, %v722
        %757 = vadd.xlane.f32.xlu0 %v756
        %v758 = vpop.xlane.xlu0 %757
        %v759 = vadd.f32 %v723, %v724
        %760 = vadd.xlane.f32.xlu0 %v759
        %v761 = vpop.xlane.xlu0 %760
        %v762 = vadd.f32 %v725, %v726
        %763 = vadd.xlane.f32.xlu0 %v762
        %v764 = vpop.xlane.xlu0 %763
        %v765 = vadd.f32 %v727, %v728
        %766 = vadd.xlane.f32.xlu0 %v765
        %v767 = vpop.xlane.xlu0 %766
        %v768 = vadd.f32 %v729, %v730
        %769 = vadd.xlane.f32.xlu0 %v768
        %v770 = vpop.xlane.xlu0 %769
        %v771 = vadd.f32 %v731, %v732
        %772 = vadd.xlane.f32.xlu0 %v771
        %v773 = vpop.xlane.xlu0 %772
        %v774 = vadd.f32 %v733, %v734
        %775 = vadd.xlane.f32.xlu0 %v774
        %v776 = vpop.xlane.xlu0 %775
        %v777 = vadd.f32 %v735, %v736
        %778 = vadd.xlane.f32.xlu0 %v777
        %v779 = vpop.xlane.xlu0 %778
        %v780 = vadd.f32 %v737, %v738
        %781 = vadd.xlane.f32.xlu0 %v780
        %v782 = vpop.xlane.xlu0 %781
        %v783 = vadd.f32 %v739, %v740
        %784 = vadd.xlane.f32.xlu0 %v783
        %v785 = vpop.xlane.xlu0 %784
        %v786 = vadd.f32 %v741, %v742
        %787 = vadd.xlane.f32.xlu0 %v786
        %v788 = vpop.xlane.xlu0 %787
        %v789 = vadd.f32 %v743, %v744
        %790 = vadd.xlane.f32.xlu0 %v789
        %v791 = vpop.xlane.xlu0 %790
        %v792 = vadd.f32 %v745, %v746
        %793 = vadd.xlane.f32.xlu0 %v792
        %v794 = vpop.xlane.xlu0 %793
        %v795 = vmul.f32 %v749, %v666
        %v796 = vmul.f32 %v752, %v666
        %v797 = vmul.f32 %v755, %v666
        %v798 = vmul.f32 %v758, %v666
        %v799 = vmul.f32 %v761, %v666
        %v800 = vmul.f32 %v764, %v666
        %v801 = vmul.f32 %v767, %v666
        %v802 = vmul.f32 %v770, %v666
        %v803 = vmul.f32 %v773, %v666
        %v804 = vmul.f32 %v776, %v666
        %v805 = vmul.f32 %v779, %v666
        %v806 = vmul.f32 %v782, %v666
        %v807 = vmul.f32 %v785, %v666
        %v808 = vmul.f32 %v788, %v666
        %v809 = vmul.f32 %v791, %v666
        %v810 = vmul.f32 %v794, %v666
        %v811 = vadd.f32 %v795, 1e-05
        %v812 = vadd.f32 %v796, 1e-05
        %v813 = vadd.f32 %v797, 1e-05
        %v814 = vadd.f32 %v798, 1e-05
        %v815 = vadd.f32 %v799, 1e-05
        %v816 = vadd.f32 %v800, 1e-05
        %v817 = vadd.f32 %v801, 1e-05
        %v818 = vadd.f32 %v802, 1e-05
        %v819 = vadd.f32 %v803, 1e-05
        %v820 = vadd.f32 %v804, 1e-05
        %v821 = vadd.f32 %v805, 1e-05
        %v822 = vadd.f32 %v806, 1e-05
        %v823 = vadd.f32 %v807, 1e-05
        %v824 = vadd.f32 %v808, 1e-05
        %v825 = vadd.f32 %v809, 1e-05
        %v826 = vadd.f32 %v810, 1e-05
        %v827 = vrsqrt.pop %v811
        %v828 = vrsqrt.pop %v812
        %v829 = vrsqrt.pop %v813
        %v830 = vrsqrt.pop %v814
        %v831 = vrsqrt.pop %v815
        %v832 = vrsqrt.pop %v816
        %v833 = vrsqrt.pop %v817
        %v834 = vrsqrt.pop %v818
        %v835 = vrsqrt.pop %v819
        %v836 = vrsqrt.pop %v820
        %v837 = vrsqrt.pop %v821
        %v838 = vrsqrt.pop %v822
        %v839 = vrsqrt.pop %v823
        %v840 = vrsqrt.pop %v824
        %v841 = vrsqrt.pop %v825
        %v842 = vrsqrt.pop %v826
        %v843 = vmul.f32 %v683, %v827
        %v844 = vmul.f32 %v684, %v827
        %v845 = vmul.f32 %v685, %v828
        %v846 = vmul.f32 %v686, %v828
        %v847 = vmul.f32 %v687, %v829
        %v848 = vmul.f32 %v688, %v829
        %v849 = vmul.f32 %v689, %v830
        %v850 = vmul.f32 %v690, %v830
        %v851 = vmul.f32 %v691, %v831
        %v852 = vmul.f32 %v692, %v831
        %v853 = vmul.f32 %v693, %v832
        %v854 = vmul.f32 %v694, %v832
        %v855 = vmul.f32 %v695, %v833
        %v856 = vmul.f32 %v696, %v833
        %v857 = vmul.f32 %v697, %v834
        %v858 = vmul.f32 %v698, %v834
        %v859 = vmul.f32 %v699, %v835
        %v860 = vmul.f32 %v700, %v835
        %v861 = vmul.f32 %v701, %v836
        %v862 = vmul.f32 %v702, %v836
        %v863 = vmul.f32 %v703, %v837
        %v864 = vmul.f32 %v704, %v837
        %v865 = vmul.f32 %v705, %v838
        %v866 = vmul.f32 %v706, %v838
        %v867 = vmul.f32 %v707, %v839
        %v868 = vmul.f32 %v708, %v839
        %v869 = vmul.f32 %v709, %v840
        %v870 = vmul.f32 %v710, %v840
        %v871 = vmul.f32 %v711, %v841
        %v872 = vmul.f32 %v712, %v841
        %v873 = vmul.f32 %v713, %v842
        %v874 = vmul.f32 %v714, %v842
        %v875 = vld [vmem:[%s3] sm:$0x3]
        %v877 = vlaneseq
        %v878 = vshrl.u32 %v877, 7
        %v879 = vsub.s32 0, %v878
        %v880 = vrot.slane %v875, %v879
        %v881 = vlaneseq
        %v882 = vshrl.u32 %v881, 7
        %v883 = vsub.s32 1, %v882
        %v884 = vrot.slane %v875, %v883
        %v887 = vmul.f32 %v843, %v880
        %v888 = vmul.f32 %v844, %v884
        %v889 = vmul.f32 %v845, %v880
        %v890 = vmul.f32 %v846, %v884
        %v891 = vmul.f32 %v847, %v880
        %v892 = vmul.f32 %v848, %v884
        %v893 = vmul.f32 %v849, %v880
        %v894 = vmul.f32 %v850, %v884
        %v895 = vmul.f32 %v851, %v880
        %v896 = vmul.f32 %v852, %v884
        %v897 = vmul.f32 %v853, %v880
        %v898 = vmul.f32 %v854, %v884
        %v899 = vmul.f32 %v855, %v880
        %v900 = vmul.f32 %v856, %v884
        %v901 = vmul.f32 %v857, %v880
        %v902 = vmul.f32 %v858, %v884
        %v903 = vmul.f32 %v859, %v880
        %v904 = vmul.f32 %v860, %v884
        %v905 = vmul.f32 %v861, %v880
        %v906 = vmul.f32 %v862, %v884
        %v907 = vmul.f32 %v863, %v880
        %v908 = vmul.f32 %v864, %v884
        %v909 = vmul.f32 %v865, %v880
        %v910 = vmul.f32 %v866, %v884
        %v911 = vmul.f32 %v867, %v880
        %v912 = vmul.f32 %v868, %v884
        %v913 = vmul.f32 %v869, %v880
        %v914 = vmul.f32 %v870, %v884
        %v915 = vmul.f32 %v871, %v880
        %v916 = vmul.f32 %v872, %v884
        %v917 = vmul.f32 %v873, %v880
        %v918 = vmul.f32 %v874, %v884
        %v919 = vld [vmem:[%s4] sm:$0x3]
        %v921 = vlaneseq
        %v922 = vshrl.u32 %v921, 7
        %v923 = vsub.s32 0, %v922
        %v924 = vrot.slane %v919, %v923
        %v925 = vlaneseq
        %v926 = vshrl.u32 %v925, 7
        %v927 = vsub.s32 1, %v926
        %v928 = vrot.slane %v919, %v927
        %v931 = vadd.f32 %v887, %v924
        %v932 = vadd.f32 %v888, %v928
        %v933 = vadd.f32 %v889, %v924
        %v934 = vadd.f32 %v890, %v928
        %v935 = vadd.f32 %v891, %v924
        %v936 = vadd.f32 %v892, %v928
        %v937 = vadd.f32 %v893, %v924
        %v938 = vadd.f32 %v894, %v928
        %v939 = vadd.f32 %v895, %v924
        %v940 = vadd.f32 %v896, %v928
        %v941 = vadd.f32 %v897, %v924
        %v942 = vadd.f32 %v898, %v928
        %v943 = vadd.f32 %v899, %v924
        %v944 = vadd.f32 %v900, %v928
        %v945 = vadd.f32 %v901, %v924
        %v946 = vadd.f32 %v902, %v928
        %v947 = vadd.f32 %v903, %v924
        %v948 = vadd.f32 %v904, %v928
        %v949 = vadd.f32 %v905, %v924
        %v950 = vadd.f32 %v906, %v928
        %v951 = vadd.f32 %v907, %v924
        %v952 = vadd.f32 %v908, %v928
        %v953 = vadd.f32 %v909, %v924
        %v954 = vadd.f32 %v910, %v928
        %v955 = vadd.f32 %v911, %v924
        %v956 = vadd.f32 %v912, %v928
        %v957 = vadd.f32 %v913, %v924
        %v958 = vadd.f32 %v914, %v928
        %v959 = vadd.f32 %v915, %v924
        %v960 = vadd.f32 %v916, %v928
        %v961 = vadd.f32 %v917, %v924
        %v962 = vadd.f32 %v918, %v928
        %vm963 = vcmp.ge.f32.partialorder %v931, 0.0
        %vm964 = vcmp.ge.f32.partialorder %v932, 0.0
        %vm965 = vcmp.ge.f32.partialorder %v933, 0.0
        %vm966 = vcmp.ge.f32.partialorder %v934, 0.0
        %vm967 = vcmp.ge.f32.partialorder %v935, 0.0
        %vm968 = vcmp.ge.f32.partialorder %v936, 0.0
        %vm969 = vcmp.ge.f32.partialorder %v937, 0.0
        %vm970 = vcmp.ge.f32.partialorder %v938, 0.0
        %vm971 = vcmp.ge.f32.partialorder %v939, 0.0
        %vm972 = vcmp.ge.f32.partialorder %v940, 0.0
        %vm973 = vcmp.ge.f32.partialorder %v941, 0.0
        %vm974 = vcmp.ge.f32.partialorder %v942, 0.0
        %vm975 = vcmp.ge.f32.partialorder %v943, 0.0
        %vm976 = vcmp.ge.f32.partialorder %v944, 0.0
        %vm977 = vcmp.ge.f32.partialorder %v945, 0.0
        %vm978 = vcmp.ge.f32.partialorder %v946, 0.0
        %vm979 = vcmp.ge.f32.partialorder %v947, 0.0
        %vm980 = vcmp.ge.f32.partialorder %v948, 0.0
        %vm981 = vcmp.ge.f32.partialorder %v949, 0.0
        %vm982 = vcmp.ge.f32.partialorder %v950, 0.0
        %vm983 = vcmp.ge.f32.partialorder %v951, 0.0
        %vm984 = vcmp.ge.f32.partialorder %v952, 0.0
        %vm985 = vcmp.ge.f32.partialorder %v953, 0.0
        %vm986 = vcmp.ge.f32.partialorder %v954, 0.0
        %vm987 = vcmp.ge.f32.partialorder %v955, 0.0
        %vm988 = vcmp.ge.f32.partialorder %v956, 0.0
        %vm989 = vcmp.ge.f32.partialorder %v957, 0.0
        %vm990 = vcmp.ge.f32.partialorder %v958, 0.0
        %vm991 = vcmp.ge.f32.partialorder %v959, 0.0
        %vm992 = vcmp.ge.f32.partialorder %v960, 0.0
        %vm993 = vcmp.ge.f32.partialorder %v961, 0.0
        %vm994 = vcmp.ge.f32.partialorder %v962, 0.0
        %v995 = vmul.f32 %v931, 0.01
        %v996 = vmul.f32 %v932, 0.01
        %v997 = vmul.f32 %v933, 0.01
        %v998 = vmul.f32 %v934, 0.01
        %v999 = vmul.f32 %v935, 0.01
        %v1000 = vmul.f32 %v936, 0.01
        %v1001 = vmul.f32 %v937, 0.01
        %v1002 = vmul.f32 %v938, 0.01
        %v1003 = vmul.f32 %v939, 0.01
        %v1004 = vmul.f32 %v940, 0.01
        %v1005 = vmul.f32 %v941, 0.01
        %v1006 = vmul.f32 %v942, 0.01
        %v1007 = vmul.f32 %v943, 0.01
        %v1008 = vmul.f32 %v944, 0.01
        %v1009 = vmul.f32 %v945, 0.01
        %v1010 = vmul.f32 %v946, 0.01
        %v1011 = vmul.f32 %v947, 0.01
        %v1012 = vmul.f32 %v948, 0.01
        %v1013 = vmul.f32 %v949, 0.01
        %v1014 = vmul.f32 %v950, 0.01
        %v1015 = vmul.f32 %v951, 0.01
        %v1016 = vmul.f32 %v952, 0.01
        %v1017 = vmul.f32 %v953, 0.01
        %v1018 = vmul.f32 %v954, 0.01
        %v1019 = vmul.f32 %v955, 0.01
        %v1020 = vmul.f32 %v956, 0.01
        %v1021 = vmul.f32 %v957, 0.01
        %v1022 = vmul.f32 %v958, 0.01
        %v1023 = vmul.f32 %v959, 0.01
        %v1024 = vmul.f32 %v960, 0.01
        %v1025 = vmul.f32 %v961, 0.01
        %v1026 = vmul.f32 %v962, 0.01
        %v1027 = vsel %vm963, %v931, %v995
        %v1028 = vsel %vm964, %v932, %v996
        %v1029 = vsel %vm965, %v933, %v997
        %v1030 = vsel %vm966, %v934, %v998
        %v1031 = vsel %vm967, %v935, %v999
        %v1032 = vsel %vm968, %v936, %v1000
        %v1033 = vsel %vm969, %v937, %v1001
        %v1034 = vsel %vm970, %v938, %v1002
        %v1035 = vsel %vm971, %v939, %v1003
        %v1036 = vsel %vm972, %v940, %v1004
        %v1037 = vsel %vm973, %v941, %v1005
        %v1038 = vsel %vm974, %v942, %v1006
        %v1039 = vsel %vm975, %v943, %v1007
        %v1040 = vsel %vm976, %v944, %v1008
        %v1041 = vsel %vm977, %v945, %v1009
        %v1042 = vsel %vm978, %v946, %v1010
        %v1043 = vsel %vm979, %v947, %v1011
        %v1044 = vsel %vm980, %v948, %v1012
        %v1045 = vsel %vm981, %v949, %v1013
        %v1046 = vsel %vm982, %v950, %v1014
        %v1047 = vsel %vm983, %v951, %v1015
        %v1048 = vsel %vm984, %v952, %v1016
        %v1049 = vsel %vm985, %v953, %v1017
        %v1050 = vsel %vm986, %v954, %v1018
        %v1051 = vsel %vm987, %v955, %v1019
        %v1052 = vsel %vm988, %v956, %v1020
        %v1053 = vsel %vm989, %v957, %v1021
        %v1054 = vsel %vm990, %v958, %v1022
        %v1055 = vsel %vm991, %v959, %v1023
        %v1056 = vsel %vm992, %v960, %v1024
        %v1057 = vsel %vm993, %v961, %v1025
        %v1058 = vsel %vm994, %v962, %v1026
        %1059 = vst [vmem:[%s378] sm:$0xff] %v1027
        %1060 = vst [vmem:[%s378 + $0x8] sm:$0xff] %v1028
        %1061 = vst [vmem:[%s378 + $0x10] sm:$0xff] %v1029
        %1062 = vst [vmem:[%s378 + $0x18] sm:$0xff] %v1030
        %1063 = vst [vmem:[%s378 + $0x20] sm:$0xff] %v1031
        %1064 = vst [vmem:[%s378 + $0x28] sm:$0xff] %v1032
        %1065 = vst [vmem:[%s378 + $0x30] sm:$0xff] %v1033
        %1066 = vst [vmem:[%s378 + $0x38] sm:$0xff] %v1034
        %1067 = vst [vmem:[%s378 + $0x40] sm:$0xff] %v1035
        %1068 = vst [vmem:[%s378 + $0x48] sm:$0xff] %v1036
        %1069 = vst [vmem:[%s378 + $0x50] sm:$0xff] %v1037
        %1070 = vst [vmem:[%s378 + $0x58] sm:$0xff] %v1038
        %1071 = vst [vmem:[%s378 + $0x60] sm:$0xff] %v1039
        %1072 = vst [vmem:[%s378 + $0x68] sm:$0xff] %v1040
        %1073 = vst [vmem:[%s378 + $0x70] sm:$0xff] %v1041
        %1074 = vst [vmem:[%s378 + $0x78] sm:$0xff] %v1042
        %1075 = vst [vmem:[%s378 + $0x80] sm:$0xff] %v1043
        %1076 = vst [vmem:[%s378 + $0x88] sm:$0xff] %v1044
        %1077 = vst [vmem:[%s378 + $0x90] sm:$0xff] %v1045
        %1078 = vst [vmem:[%s378 + $0x98] sm:$0xff] %v1046
        %1079 = vst [vmem:[%s378 + $0xa0] sm:$0xff] %v1047
        %1080 = vst [vmem:[%s378 + $0xa8] sm:$0xff] %v1048
        %1081 = vst [vmem:[%s378 + $0xb0] sm:$0xff] %v1049
        %1082 = vst [vmem:[%s378 + $0xb8] sm:$0xff] %v1050
        %1083 = vst [vmem:[%s378 + $0xc0] sm:$0xff] %v1051
        %1084 = vst [vmem:[%s378 + $0xc8] sm:$0xff] %v1052
        %1085 = vst [vmem:[%s378 + $0xd0] sm:$0xff] %v1053
        %1086 = vst [vmem:[%s378 + $0xd8] sm:$0xff] %v1054
        %1087 = vst [vmem:[%s378 + $0xe0] sm:$0xff] %v1055
        %1088 = vst [vmem:[%s378 + $0xe8] sm:$0xff] %v1056
        %1089 = vst [vmem:[%s378 + $0xf0] sm:$0xff] %v1057
        %1090 = vst [vmem:[%s378 + $0xf8] sm:$0xff] %v1058
        %v1091 = vld [vmem:[#allocation7] sm:$0xff]
        %v1092 = vld [vmem:[#allocation7 + $0x8] sm:$0xff]
        %v1093 = vld [vmem:[#allocation7 + $0x10] sm:$0xff]
        %v1094 = vld [vmem:[#allocation7 + $0x18] sm:$0xff]
        %v1095 = vld [vmem:[#allocation7 + $0x20] sm:$0xff]
        %v1096 = vld [vmem:[#allocation7 + $0x28] sm:$0xff]
        %v1097 = vld [vmem:[#allocation7 + $0x30] sm:$0xff]
        %v1098 = vld [vmem:[#allocation7 + $0x38] sm:$0xff]
        %v1099 = vld [vmem:[#allocation7 + $0x40] sm:$0xff]
        %v1100 = vld [vmem:[#allocation7 + $0x48] sm:$0xff]
        %v1101 = vld [vmem:[#allocation7 + $0x50] sm:$0xff]
        %v1102 = vld [vmem:[#allocation7 + $0x58] sm:$0xff]
        %v1103 = vld [vmem:[#allocation7 + $0x60] sm:$0xff]
        %v1104 = vld [vmem:[#allocation7 + $0x68] sm:$0xff]
        %v1105 = vld [vmem:[#allocation7 + $0x70] sm:$0xff]
        %v1106 = vld [vmem:[#allocation7 + $0x78] sm:$0xff]
        %v1107 = vld [vmem:[#allocation7 + $0x80] sm:$0xff]
        %v1108 = vld [vmem:[#allocation7 + $0x88] sm:$0xff]
        %v1109 = vld [vmem:[#allocation7 + $0x90] sm:$0xff]
        %v1110 = vld [vmem:[#allocation7 + $0x98] sm:$0xff]
        %v1111 = vld [vmem:[#allocation7 + $0xa0] sm:$0xff]
        %v1112 = vld [vmem:[#allocation7 + $0xa8] sm:$0xff]
        %v1113 = vld [vmem:[#allocation7 + $0xb0] sm:$0xff]
        %v1114 = vld [vmem:[#allocation7 + $0xb8] sm:$0xff]
        %v1115 = vld [vmem:[#allocation7 + $0xc0] sm:$0xff]
        %v1116 = vld [vmem:[#allocation7 + $0xc8] sm:$0xff]
        %v1117 = vld [vmem:[#allocation7 + $0xd0] sm:$0xff]
        %v1118 = vld [vmem:[#allocation7 + $0xd8] sm:$0xff]
        %v1119 = vld [vmem:[#allocation7 + $0xe0] sm:$0xff]
        %v1120 = vld [vmem:[#allocation7 + $0xe8] sm:$0xff]
        %v1121 = vld [vmem:[#allocation7 + $0xf0] sm:$0xff]
        %v1122 = vld [vmem:[#allocation7 + $0xf8] sm:$0xff]
        %v1123 = vld [vmem:[#allocation7 + $0x100] sm:$0xff]
        %v1124 = vld [vmem:[#allocation7 + $0x108] sm:$0xff]
        %v1125 = vld [vmem:[#allocation7 + $0x110] sm:$0xff]
        %v1126 = vld [vmem:[#allocation7 + $0x118] sm:$0xff]
        %v1127 = vld [vmem:[#allocation7 + $0x120] sm:$0xff]
        %v1128 = vld [vmem:[#allocation7 + $0x128] sm:$0xff]
        %v1129 = vld [vmem:[#allocation7 + $0x130] sm:$0xff]
        %v1130 = vld [vmem:[#allocation7 + $0x138] sm:$0xff]
        %v1131 = vld [vmem:[#allocation7 + $0x140] sm:$0xff]
        %v1132 = vld [vmem:[#allocation7 + $0x148] sm:$0xff]
        %v1133 = vld [vmem:[#allocation7 + $0x150] sm:$0xff]
        %v1134 = vld [vmem:[#allocation7 + $0x158] sm:$0xff]
        %v1135 = vld [vmem:[#allocation7 + $0x160] sm:$0xff]
        %v1136 = vld [vmem:[#allocation7 + $0x168] sm:$0xff]
        %v1137 = vld [vmem:[#allocation7 + $0x170] sm:$0xff]
        %v1138 = vld [vmem:[#allocation7 + $0x178] sm:$0xff]
        %v1139 = vld [vmem:[#allocation7 + $0x180] sm:$0xff]
        %v1140 = vld [vmem:[#allocation7 + $0x188] sm:$0xff]
        %v1141 = vld [vmem:[#allocation7 + $0x190] sm:$0xff]
        %v1142 = vld [vmem:[#allocation7 + $0x198] sm:$0xff]
        %v1143 = vld [vmem:[#allocation7 + $0x1a0] sm:$0xff]
        %v1144 = vld [vmem:[#allocation7 + $0x1a8] sm:$0xff]
        %v1145 = vld [vmem:[#allocation7 + $0x1b0] sm:$0xff]
        %v1146 = vld [vmem:[#allocation7 + $0x1b8] sm:$0xff]
        %v1147 = vld [vmem:[#allocation7 + $0x1c0] sm:$0xff]
        %v1148 = vld [vmem:[#allocation7 + $0x1c8] sm:$0xff]
        %v1149 = vld [vmem:[#allocation7 + $0x1d0] sm:$0xff]
        %v1150 = vld [vmem:[#allocation7 + $0x1d8] sm:$0xff]
        %v1151 = vld [vmem:[#allocation7 + $0x1e0] sm:$0xff]
        %v1152 = vld [vmem:[#allocation7 + $0x1e8] sm:$0xff]
        %v1153 = vld [vmem:[#allocation7 + $0x1f0] sm:$0xff]
        %v1154 = vld [vmem:[#allocation7 + $0x1f8] sm:$0xff]
        %v1155 = vld [vmem:[%s6] sm:$0x3]
        %v1157 = vlaneseq
        %v1158 = vshrl.u32 %v1157, 7
        %v1159 = vsub.s32 0, %v1158
        %v1160 = vrot.slane %v1155, %v1159
        %v1161 = vlaneseq
        %v1162 = vshrl.u32 %v1161, 7
        %v1163 = vsub.s32 1, %v1162
        %v1164 = vrot.slane %v1155, %v1163
        %1167 = vmatprep.subr.mxu0 %v1092
        %1168 = vmatpush1.msra.mxu0 %v1091
        %1169 = vmatprep.subr.mxu0 %v1094
        %1170 = vmatpush1.msra.mxu0 %v1093
        %1171 = vmatprep.subr.mxu0 %v1096
        %1172 = vmatpush1.msra.mxu0 %v1095
        %1173 = vmatprep.subr.mxu0 %v1098
        %1174 = vmatpush1.msra.mxu0 %v1097
        %1175 = vmatprep.subr.mxu0 %v1100
        %1176 = vmatpush1.msra.mxu0 %v1099
        %1177 = vmatprep.subr.mxu0 %v1102
        %1178 = vmatpush1.msra.mxu0 %v1101
        %1179 = vmatprep.subr.mxu0 %v1104
        %1180 = vmatpush1.msra.mxu0 %v1103
        %1181 = vmatprep.subr.mxu0 %v1106
        %1182 = vmatpush1.msra.mxu0 %v1105
        %1183 = vmatprep.subr.mxu0 %v1108
        %1184 = vmatpush1.msra.mxu0 %v1107
        %1185 = vmatprep.subr.mxu0 %v1110
        %1186 = vmatpush1.msra.mxu0 %v1109
        %1187 = vmatprep.subr.mxu0 %v1112
        %1188 = vmatpush1.msra.mxu0 %v1111
        %1189 = vmatprep.subr.mxu0 %v1114
        %1190 = vmatpush1.msra.mxu0 %v1113
        %1191 = vmatprep.subr.mxu0 %v1116
        %1192 = vmatpush1.msra.mxu0 %v1115
        %1193 = vmatprep.subr.mxu0 %v1118
        %1194 = vmatpush1.msra.mxu0 %v1117
        %1195 = vmatprep.subr.mxu0 %v1120
        %1196 = vmatpush1.msra.mxu0 %v1119
        %1197 = vmatprep.subr.mxu0 %v1122
        %1198 = vmatpush1.msra.mxu0 %v1121
        %1199 = vmatprep.subr.mxu0 %v1124
        %1200 = vmatpush1.msra.mxu0 %v1123
        %1201 = vmatprep.subr.mxu0 %v1126
        %1202 = vmatpush1.msra.mxu0 %v1125
        %1203 = vmatprep.subr.mxu0 %v1128
        %1204 = vmatpush1.msra.mxu0 %v1127
        %1205 = vmatprep.subr.mxu0 %v1130
        %1206 = vmatpush1.msra.mxu0 %v1129
        %1207 = vmatprep.subr.mxu0 %v1132
        %1208 = vmatpush1.msra.mxu0 %v1131
        %1209 = vmatprep.subr.mxu0 %v1134
        %1210 = vmatpush1.msra.mxu0 %v1133
        %1211 = vmatprep.subr.mxu0 %v1136
        %1212 = vmatpush1.msra.mxu0 %v1135
        %1213 = vmatprep.subr.mxu0 %v1138
        %1214 = vmatpush1.msra.mxu0 %v1137
        %1215 = vmatprep.subr.mxu0 %v1140
        %1216 = vmatpush1.msra.mxu0 %v1139
        %1217 = vmatprep.subr.mxu0 %v1142
        %1218 = vmatpush1.msra.mxu0 %v1141
        %1219 = vmatprep.subr.mxu0 %v1144
        %1220 = vmatpush1.msra.mxu0 %v1143
        %1221 = vmatprep.subr.mxu0 %v1146
        %1222 = vmatpush1.msra.mxu0 %v1145
        %1223 = vmatprep.subr.mxu0 %v1148
        %1224 = vmatpush1.msra.mxu0 %v1147
        %1225 = vmatprep.subr.mxu0 %v1150
        %1226 = vmatpush1.msra.mxu0 %v1149
        %1227 = vmatprep.subr.mxu0 %v1152
        %1228 = vmatpush1.msra.mxu0 %v1151
        %1229 = vmatprep.subr.mxu0 %v1154
        %1230 = vmatpush1.msra.mxu0 %v1153
        %1231 = vmatprep.mubr.f32.mxu0 %v1028
        %1232 = vmatmul.mubr.f32.gmra.mrb[0].mxu0 %v1027
        %v1233 = vpop.f32.mrb[0].mxu0
        %v1234 = vadd.f32 %v1160, %v1233
        %v1235 = vpop.f32.mrb[0].mxu0
        %v1236 = vadd.f32 %v1164, %v1235
        %1237 = vmatprep.mubr.f32.mxu0 %v1030
        %1238 = vmatmul.mubr.f32.gmra.mrb[0].mxu0 %v1029
        %v1239 = vpop.f32.mrb[0].mxu0
        %v1240 = vadd.f32 %v1160, %v1239
        %v1241 = vpop.f32.mrb[0].mxu0
        %v1242 = vadd.f32 %v1164, %v1241
        %1243 = vmatprep.mubr.f32.mxu0 %v1032
        %1244 = vmatmul.mubr.f32.gmra.mrb[0].mxu0 %v1031
        %v1245 = vpop.f32.mrb[0].mxu0
        %v1246 = vadd.f32 %v1160, %v1245
        %v1247 = vpop.f32.mrb[0].mxu0
        %v1248 = vadd.f32 %v1164, %v1247
        %1249 = vmatprep.mubr.f32.mxu0 %v1034
        %1250 = vmatmul.mubr.f32.gmra.mrb[0].mxu0 %v1033
        %v1251 = vpop.f32.mrb[0].mxu0
        %v1252 = vadd.f32 %v1160, %v1251
        %v1253 = vpop.f32.mrb[0].mxu0
        %v1254 = vadd.f32 %v1164, %v1253
        %1255 = vmatprep.mubr.f32.mxu0 %v1036
        %1256 = vmatmul.mubr.f32.gmra.mrb[0].mxu0 %v1035
        %v1257 = vpop.f32.mrb[0].mxu0
        %v1258 = vadd.f32 %v1160, %v1257
        %v1259 = vpop.f32.mrb[0].mxu0
        %v1260 = vadd.f32 %v1164, %v1259
        %1261 = vmatprep.mubr.f32.mxu0 %v1038
        %1262 = vmatmul.mubr.f32.gmra.mrb[0].mxu0 %v1037
        %v1263 = vpop.f32.mrb[0].mxu0
        %v1264 = vadd.f32 %v1160, %v1263
        %v1265 = vpop.f32.mrb[0].mxu0
        %v1266 = vadd.f32 %v1164, %v1265
        %1267 = vmatprep.mubr.f32.mxu0 %v1040
        %1268 = vmatmul.mubr.f32.gmra.mrb[0].mxu0 %v1039
        %v1269 = vpop.f32.mrb[0].mxu0
        %v1270 = vadd.f32 %v1160, %v1269
        %v1271 = vpop.f32.mrb[0].mxu0
        %v1272 = vadd.f32 %v1164, %v1271
        %1273 = vmatprep.mubr.f32.mxu0 %v1042
        %1274 = vmatmul.mubr.f32.gmra.mrb[0].mxu0 %v1041
        %v1275 = vpop.f32.mrb[0].mxu0
        %v1276 = vadd.f32 %v1160, %v1275
        %v1277 = vpop.f32.mrb[0].mxu0
        %v1278 = vadd.f32 %v1164, %v1277
        %1279 = vmatprep.mubr.f32.mxu0 %v1044
        %1280 = vmatmul.mubr.f32.gmra.mrb[0].mxu0 %v1043
        %v1281 = vpop.f32.mrb[0].mxu0
        %v1282 = vadd.f32 %v1160, %v1281
        %v1283 = vpop.f32.mrb[0].mxu0
        %v1284 = vadd.f32 %v1164, %v1283
        %1285 = vmatprep.mubr.f32.mxu0 %v1046
        %1286 = vmatmul.mubr.f32.gmra.mrb[0].mxu0 %v1045
        %v1287 = vpop.f32.mrb[0].mxu0
        %v1288 = vadd.f32 %v1160, %v1287
        %v1289 = vpop.f32.mrb[0].mxu0
        %v1290 = vadd.f32 %v1164, %v1289
        %1291 = vmatprep.mubr.f32.mxu0 %v1048
        %1292 = vmatmul.mubr.f32.gmra.mrb[0].mxu0 %v1047
        %v1293 = vpop.f32.mrb[0].mxu0
        %v1294 = vadd.f32 %v1160, %v1293
        %v1295 = vpop.f32.mrb[0].mxu0
        %v1296 = vadd.f32 %v1164, %v1295
        %1297 = vmatprep.mubr.f32.mxu0 %v1050
        %1298 = vmatmul.mubr.f32.gmra.mrb[0].mxu0 %v1049
        %v1299 = vpop.f32.mrb[0].mxu0
        %v1300 = vadd.f32 %v1160, %v1299
        %v1301 = vpop.f32.mrb[0].mxu0
        %v1302 = vadd.f32 %v1164, %v1301
        %1303 = vmatprep.mubr.f32.mxu0 %v1052
        %1304 = vmatmul.mubr.f32.gmra.mrb[0].mxu0 %v1051
        %v1305 = vpop.f32.mrb[0].mxu0
        %v1306 = vadd.f32 %v1160, %v1305
        %v1307 = vpop.f32.mrb[0].mxu0
        %v1308 = vadd.f32 %v1164, %v1307
        %1309 = vmatprep.mubr.f32.mxu0 %v1054
        %1310 = vmatmul.mubr.f32.gmra.mrb[0].mxu0 %v1053
        %v1311 = vpop.f32.mrb[0].mxu0
        %v1312 = vadd.f32 %v1160, %v1311
        %v1313 = vpop.f32.mrb[0].mxu0
        %v1314 = vadd.f32 %v1164, %v1313
        %1315 = vmatprep.mubr.f32.mxu0 %v1056
        %1316 = vmatmul.mubr.f32.gmra.mrb[0].mxu0 %v1055
        %v1317 = vpop.f32.mrb[0].mxu0
        %v1318 = vadd.f32 %v1160, %v1317
        %v1319 = vpop.f32.mrb[0].mxu0
        %v1320 = vadd.f32 %v1164, %v1319
        %1321 = vmatprep.mubr.f32.mxu0 %v1058
        %1322 = vmatmul.mubr.f32.gmra.mrb[0].mxu0 %v1057
        %v1323 = vpop.f32.mrb[0].mxu0
        %v1324 = vadd.f32 %v1160, %v1323
        %v1325 = vpop.f32.mrb[0].mxu0
        %v1326 = vadd.f32 %v1164, %v1325
        %1327 = vdwg.mxu0
        %1328 = vst [vmem:[%s385] sm:$0xff] %v1234
        %1329 = vst [vmem:[%s385 + $0x8] sm:$0xff] %v1236
        %1330 = vst [vmem:[%s385 + $0x10] sm:$0xff] %v1240
        %1331 = vst [vmem:[%s385 + $0x18] sm:$0xff] %v1242
        %1332 = vst [vmem:[%s385 + $0x20] sm:$0xff] %v1246
        %1333 = vst [vmem:[%s385 + $0x28] sm:$0xff] %v1248
        %1334 = vst [vmem:[%s385 + $0x30] sm:$0xff] %v1252
        %1335 = vst [vmem:[%s385 + $0x38] sm:$0xff] %v1254
        %1336 = vst [vmem:[%s385 + $0x40] sm:$0xff] %v1258
        %1337 = vst [vmem:[%s385 + $0x48] sm:$0xff] %v1260
        %1338 = vst [vmem:[%s385 + $0x50] sm:$0xff] %v1264
        %1339 = vst [vmem:[%s385 + $0x58] sm:$0xff] %v1266
        %1340 = vst [vmem:[%s385 + $0x60] sm:$0xff] %v1270
        %1341 = vst [vmem:[%s385 + $0x68] sm:$0xff] %v1272
        %1342 = vst [vmem:[%s385 + $0x70] sm:$0xff] %v1276
        %1343 = vst [vmem:[%s385 + $0x78] sm:$0xff] %v1278
        %1344 = vst [vmem:[%s385 + $0x80] sm:$0xff] %v1282
        %1345 = vst [vmem:[%s385 + $0x88] sm:$0xff] %v1284
        %1346 = vst [vmem:[%s385 + $0x90] sm:$0xff] %v1288
        %1347 = vst [vmem:[%s385 + $0x98] sm:$0xff] %v1290
        %1348 = vst [vmem:[%s385 + $0xa0] sm:$0xff] %v1294
        %1349 = vst [vmem:[%s385 + $0xa8] sm:$0xff] %v1296
        %1350 = vst [vmem:[%s385 + $0xb0] sm:$0xff] %v1300
        %1351 = vst [vmem:[%s385 + $0xb8] sm:$0xff] %v1302
        %1352 = vst [vmem:[%s385 + $0xc0] sm:$0xff] %v1306
        %1353 = vst [vmem:[%s385 + $0xc8] sm:$0xff] %v1308
        %1354 = vst [vmem:[%s385 + $0xd0] sm:$0xff] %v1312
        %1355 = vst [vmem:[%s385 + $0xd8] sm:$0xff] %v1314
        %1356 = vst [vmem:[%s385 + $0xe0] sm:$0xff] %v1318
        %1357 = vst [vmem:[%s385 + $0xe8] sm:$0xff] %v1320
        %1358 = vst [vmem:[%s385 + $0xf0] sm:$0xff] %v1324
        %1359 = vst [vmem:[%s385 + $0xf8] sm:$0xff] %v1326
        %v1360 = vadd.f32 %v1234, %v1240
        %v1361 = vadd.f32 %v1360, %v1246
        %v1362 = vadd.f32 %v1361, %v1252
        %v1363 = vadd.f32 %v1362, %v1258
        %v1364 = vadd.f32 %v1363, %v1264
        %v1365 = vadd.f32 %v1364, %v1270
        %v1366 = vadd.f32 %v1365, %v1276
        %v1367 = vadd.f32 %v1366, %v1282
        %v1368 = vadd.f32 %v1367, %v1288
        %v1369 = vadd.f32 %v1368, %v1294
        %v1370 = vadd.f32 %v1369, %v1300
        %v1371 = vadd.f32 %v1370, %v1306
        %v1372 = vadd.f32 %v1371, %v1312
        %v1373 = vadd.f32 %v1372, %v1318
        %v1374 = vadd.f32 %v1373, %v1324
        %v1375 = vrot.slane %v1374, 4
        %v1376 = vadd.f32 %v1374, %v1375
        %v1377 = vrot.slane %v1376, 2
        %v1378 = vadd.f32 %v1376, %v1377
        %v1379 = vrot.slane %v1378, 1
        %v1380 = vadd.f32 %v1378, %v1379
        %v1381 = vadd.f32 %v1236, %v1242
        %v1382 = vadd.f32 %v1381, %v1248
        %v1383 = vadd.f32 %v1382, %v1254
        %v1384 = vadd.f32 %v1383, %v1260
        %v1385 = vadd.f32 %v1384, %v1266
        %v1386 = vadd.f32 %v1385, %v1272
        %v1387 = vadd.f32 %v1386, %v1278
        %v1388 = vadd.f32 %v1387, %v1284
        %v1389 = vadd.f32 %v1388, %v1290
        %v1390 = vadd.f32 %v1389, %v1296
        %v1391 = vadd.f32 %v1390, %v1302
        %v1392 = vadd.f32 %v1391, %v1308
        %v1393 = vadd.f32 %v1392, %v1314
        %v1394 = vadd.f32 %v1393, %v1320
        %v1395 = vadd.f32 %v1394, %v1326
        %v1396 = vrot.slane %v1395, 4
        %v1397 = vadd.f32 %v1395, %v1396
        %v1398 = vrot.slane %v1397, 2
        %v1399 = vadd.f32 %v1397, %v1398
        %v1400 = vrot.slane %v1399, 1
        %v1401 = vadd.f32 %v1399, %v1400
        %v1402 = vmul.f32 %v1234, %v1234
        %v1403 = vmul.f32 %v1236, %v1236
        %v1404 = vmul.f32 %v1240, %v1240
        %v1405 = vmul.f32 %v1242, %v1242
        %v1406 = vmul.f32 %v1246, %v1246
        %v1407 = vmul.f32 %v1248, %v1248
        %v1408 = vmul.f32 %v1252, %v1252
        %v1409 = vmul.f32 %v1254, %v1254
        %v1410 = vmul.f32 %v1258, %v1258
        %v1411 = vmul.f32 %v1260, %v1260
        %v1412 = vmul.f32 %v1264, %v1264
        %v1413 = vmul.f32 %v1266, %v1266
        %v1414 = vmul.f32 %v1270, %v1270
        %v1415 = vmul.f32 %v1272, %v1272
        %v1416 = vmul.f32 %v1276, %v1276
        %v1417 = vmul.f32 %v1278, %v1278
        %v1418 = vmul.f32 %v1282, %v1282
        %v1419 = vmul.f32 %v1284, %v1284
        %v1420 = vmul.f32 %v1288, %v1288
        %v1421 = vmul.f32 %v1290, %v1290
        %v1422 = vmul.f32 %v1294, %v1294
        %v1423 = vmul.f32 %v1296, %v1296
        %v1424 = vmul.f32 %v1300, %v1300
        %v1425 = vmul.f32 %v1302, %v1302
        %v1426 = vmul.f32 %v1306, %v1306
        %v1427 = vmul.f32 %v1308, %v1308
        %v1428 = vmul.f32 %v1312, %v1312
        %v1429 = vmul.f32 %v1314, %v1314
        %v1430 = vmul.f32 %v1318, %v1318
        %v1431 = vmul.f32 %v1320, %v1320
        %v1432 = vmul.f32 %v1324, %v1324
        %v1433 = vmul.f32 %v1326, %v1326
        %v1434 = vadd.f32 %v1402, %v1404
        %v1435 = vadd.f32 %v1434, %v1406
        %v1436 = vadd.f32 %v1435, %v1408
        %v1437 = vadd.f32 %v1436, %v1410
        %v1438 = vadd.f32 %v1437, %v1412
        %v1439 = vadd.f32 %v1438, %v1414
        %v1440 = vadd.f32 %v1439, %v1416
        %v1441 = vadd.f32 %v1440, %v1418
        %v1442 = vadd.f32 %v1441, %v1420
        %v1443 = vadd.f32 %v1442, %v1422
        %v1444 = vadd.f32 %v1443, %v1424
        %v1445 = vadd.f32 %v1444, %v1426
        %v1446 = vadd.f32 %v1445, %v1428
        %v1447 = vadd.f32 %v1446, %v1430
        %v1448 = vadd.f32 %v1447, %v1432
        %v1449 = vrot.slane %v1448, 4
        %v1450 = vadd.f32 %v1448, %v1449
        %v1451 = vrot.slane %v1450, 2
        %v1452 = vadd.f32 %v1450, %v1451
        %v1453 = vrot.slane %v1452, 1
        %v1454 = vadd.f32 %v1452, %v1453
        %v1455 = vadd.f32 %v1403, %v1405
        %v1456 = vadd.f32 %v1455, %v1407
        %v1457 = vadd.f32 %v1456, %v1409
        %v1458 = vadd.f32 %v1457, %v1411
        %v1459 = vadd.f32 %v1458, %v1413
        %v1460 = vadd.f32 %v1459, %v1415
        %v1461 = vadd.f32 %v1460, %v1417
        %v1462 = vadd.f32 %v1461, %v1419
        %v1463 = vadd.f32 %v1462, %v1421
        %v1464 = vadd.f32 %v1463, %v1423
        %v1465 = vadd.f32 %v1464, %v1425
        %v1466 = vadd.f32 %v1465, %v1427
        %v1467 = vadd.f32 %v1466, %v1429
        %v1468 = vadd.f32 %v1467, %v1431
        %v1469 = vadd.f32 %v1468, %v1433
        %v1470 = vrot.slane %v1469, 4
        %v1471 = vadd.f32 %v1469, %v1470
        %v1472 = vrot.slane %v1471, 2
        %v1473 = vadd.f32 %v1471, %v1472
        %v1474 = vrot.slane %v1473, 1
        %v1475 = vadd.f32 %v1473, %v1474
        %vm1476 = vcmask 1040384
        %v1477 = vsel %vm1476, %v1380, %v1454
        %v1478 = vsel %vm1476, %v1401, %v1475
        %vm1479 = vcmask 1041408
        %v1480 = vsel %vm1479, %v1477, 0.0
        %v1481 = vsel %vm1479, %v1478, 0.0
        %v1482 = vld [vmem:[#allocation11] sm:$0xff]
        %v1483 = vld [vmem:[#allocation11 + $0x8] sm:$0xff]
        %v1484 = vadd.f32 %v1482, %v1480
        %v1485 = vadd.f32 %v1483, %v1481
        %1486 = vst [vmem:[#allocation11] sm:$0xff] %v1484
        %1487 = vst [vmem:[#allocation11 + $0x8] sm:$0xff] %v1485
        %s1488 = sand.u32 %s191, 1
        %s1489 = scalar_lea.sflag [#allocation4], %s1488
        %s1490 = sand.u32 %s191, 1
        %s1491 = smul.addr %s1490, 256
        %s1492 = scalar_lea.vmem [#allocation8], %s1491
        %s1493 = sand.u32 %s31, 1
        %s1494 = scalar_lea.sflag [#allocation10], %s1493
        %s1495 = sand.u32 %s217, 1
        %s1496 = smul.addr %s1495, 256
        %s1497 = scalar_lea.vmem [#allocation9], %s1496
        // Predicated region
        $region65: #{tpu_custom_call.1} parent=47 // pred_check
          %p1498 = pneg %p201
        $region66: #{tpu_custom_call.1} parent=47 // pred_check_branch
          %1500 = sbr.rel (%p1498) target = $region68
        $region67: #{tpu_custom_call.1} parent=47 // pred_region
          %s1501 = smul.u32 16, %s31
          %s1503 = ssub.s32 4096, 4096
          %1504 = vsyncadd %s1489, %s1503
          %s1505 = smul.addr %s1501, 2
          %s1506 = smul.addr %s1505, 128
          %s1507 = scalar_lea.hbm %s7, %s1506
          %s1508 = sshll.u32 %s1492, 4
          %s1509 = int_to_ptr.vmem [resolvable:$true] %s1508
          %1514 = dma.vmem_to_hbm [thread:$0]  %s1509, 4096, %s1507, %s1489, 256, 256, 16
        $region68: #{tpu_custom_call.1} parent=47 // pred_fallthru
          _
        // Predicated region
        $region69: #{tpu_custom_call.1} parent=47 // pred_check
          %p1515 = pneg %p227
        $region70: #{tpu_custom_call.1} parent=47 // pred_check_branch
          %1517 = sbr.rel (%p1515) target = $region72
        $region71: #{tpu_custom_call.1} parent=47 // pred_region
          %s1518 = smul.u32 16, %s31
          %s1520 = ssub.s32 4096, 4096
          %1521 = vsyncadd %s1494, %s1520
          %s1522 = smul.addr %s1518, 2
          %s1523 = smul.addr %s1522, 128
          %s1524 = scalar_lea.hbm %s8, %s1523
          %s1525 = sshll.u32 %s1497, 4
          %s1526 = int_to_ptr.vmem [resolvable:$true] %s1525
          %1531 = dma.vmem_to_hbm [thread:$0]  %s1526, 4096, %s1524, %s1494, 256, 256, 16
        $region72: #{tpu_custom_call.1} parent=47 // pred_fallthru
          _
        // Predicated region
        $region73: #{tpu_custom_call.1} parent=47 // pred_check
          %p1532 = pneg %p248
        $region74: #{tpu_custom_call.1} parent=47 // pred_check_branch
          %1534 = sbr.rel (%p1532) target = $region76
        $region75: #{tpu_custom_call.1} parent=47 // pred_region
          %s1536 = ssub.s32 256, 256
          %1537 = vsyncadd [#allocation10], %s1536
          %s1539 = sshll.u32 [#allocation11], 4
          %s1540 = int_to_ptr.vmem [resolvable:$true] %s1539
          %1542 = dma.vmem_to_hbm [thread:$0]  %s1540, 256, %s9, [#allocation10]
        $region76: #{tpu_custom_call.1} parent=47 // pred_fallthru
          _
        // Predicated region
        $region77: #{tpu_custom_call.1} parent=47 // pred_check
          %p1543 = pneg %p248
        $region78: #{tpu_custom_call.1} parent=47 // pred_check_branch
          %1545 = sbr.rel (%p1543) target = $region80
        $region79: #{tpu_custom_call.1} parent=47 // pred_region
          %1546 = dma.done [#allocation10], 256
        $region80: #{tpu_custom_call.1} parent=47 // pred_fallthru
          _
      $region48: #{tpu_custom_call.1} parent=5 // pred_fallthru
        _
      %p1547 = scmp.le.s32.totalorder 2, %s26
      // Predicated region
      $region81: #{tpu_custom_call.1} parent=5 // pred_check
        %p1548 = pneg %p1547
      $region82: #{tpu_custom_call.1} parent=5 // pred_check_branch
        %1550 = sbr.rel (%p1548) target = $region84
      $region83: #{tpu_custom_call.1} parent=5 // pred_region
        %s1551 = ssub.s32 %s26, 2
        // Predicated region
        $region85: #{tpu_custom_call.1} parent=83 // pred_check
          %p1552 = pneg %p207
        $region86: #{tpu_custom_call.1} parent=83 // pred_check_branch
          %1554 = sbr.rel (%p1552) target = $region88
        $region87: #{tpu_custom_call.1} parent=83 // pred_region
          %s1555 = sand.u32 %s192, 1
          %s1556 = scalar_lea.sflag [#allocation4], %s1555
          %s1557 = sand.u32 %s192, 1
          %s1558 = smul.addr %s1557, 256
          %s1559 = scalar_lea.vmem [#allocation8], %s1558
          %1560 = dma.done %s1556, 4096
        $region88: #{tpu_custom_call.1} parent=83 // pred_fallthru
          _
        // Predicated region
        $region89: #{tpu_custom_call.1} parent=83 // pred_check
          %p1561 = pneg %p233
        $region90: #{tpu_custom_call.1} parent=83 // pred_check_branch
          %1563 = sbr.rel (%p1561) target = $region92
        $region91: #{tpu_custom_call.1} parent=83 // pred_region
          %s1564 = sand.u32 %s32, 1
          %s1565 = scalar_lea.sflag [#allocation10], %s1564
          %s1566 = sand.u32 %s218, 1
          %s1567 = smul.addr %s1566, 256
          %s1568 = scalar_lea.vmem [#allocation9], %s1567
          %1569 = dma.done %s1565, 4096
        $region92: #{tpu_custom_call.1} parent=83 // pred_fallthru
          _
      $region84: #{tpu_custom_call.1} parent=5 // pred_fallthru
        _
    $region6: #{tpu_custom_call.1} parent=1 // loop_footer
      %s30 = sadd.s32 1, %s26
    $region7: #{tpu_custom_call.1} parent=1 // loop_footer_branch
      %25 = sbr.rel target = $region3
    $region8: #{tpu_custom_call.1} parent=1 // loop_exit
      _
    %1570 = vsyncpa [#allocation3], 1
    %s1571 = scalar_lea.sflag [#allocation3], 1
    %1572 = vsyncpa %s1571, 1
    %1573 = vsyncpa [#allocation6], 1
    %1574 = vsyncpa [#allocation4], 1
    %s1575 = scalar_lea.sflag [#allocation4], 1
    %1576 = vsyncpa %s1575, 1
    %1577 = vsyncpa [#allocation10], 1
    %s1578 = scalar_lea.sflag [#allocation10], 1
    %1579 = vsyncpa %s1578, 1

</llo_original>
